<compile_context>
chip_gen: v7x
topology: tpu7x:2x2x1
jax: 0.10.0
libtpu: 0.0.40
codegen_flags: <defaults>
</compile_context>

<pallas_src>
import functools

import jax
import jax.numpy as jnp
from jax.experimental import pallas as pl
from jax.experimental.pallas import tpu as pltpu


# Conservative full-weight-residency budget. v7x has only 64 MiB VMEM per
# TensorCore (vs 128 MiB on v5e/v6e); leave headroom for the double-buffered
# x/out streams and the activation/accumulator scratch.
_WEIGHT_RESIDENCY_BUDGET = 40 << 20


# ----------------------------------------------------------------------------
# small helpers
# ----------------------------------------------------------------------------
def _round_up(n, m):
    return -(-n // m) * m


def _pick_tile(dim, prefer_multiple_steps=False):
    """Largest of {512,256,128} dividing `dim`; full extent otherwise.

    With prefer_multiple_steps=True (batch axis), prefer the largest tile that
    still yields >=2 grid steps so megacore sharding on v7x has work to split.
    """
    divisors = [c for c in (512, 256, 128) if dim % c == 0]
    if prefer_multiple_steps:
        for c in divisors:
            if dim // c >= 2:
                return c
    return divisors[0] if divisors else dim


def _fused_vmem_estimate(tm, k0_p, dims_p, x_isz, w_isz, o_isz, weight_bufs=1):
    n_last = dims_p[-1][1]
    n_max = max(n for _, n in dims_p)
    est = 2 * tm * k0_p * x_isz                                     # x tile (2 bufs)
    est += weight_bufs * sum((k * n + n) * w_isz for k, n in dims_p)  # resident W,b
    est += 2 * tm * n_last * o_isz                                  # out tile (2 bufs)
    est += tm * n_max * (4 + w_isz)                                 # f32 acc + carried act
    return est


# ----------------------------------------------------------------------------
# Fused MLP kernel: all layers in one grid step, weights resident in VMEM,
# intermediate activations never touch HBM.
# Ref order: (x_ref, w0, b0, w1, b1, ..., o_ref)
# ----------------------------------------------------------------------------
def _mlp_fused_kernel(*refs, num_layers, matmul_dtype):
    x_ref = refs[0]
    o_ref = refs[-1]
    wb = refs[1:-1]

    # Load at native dtype; single cast straight to the matmul dtype.
    h = x_ref[...]
    if h.dtype != matmul_dtype:
        h = h.astype(matmul_dtype)

    for layer in range(num_layers):
        w = wb[2 * layer][...]          # pre-cast to matmul_dtype in the wrapper
        b = wb[2 * layer + 1][...]
        # bf16 (or f32) operands on the MXU, f32 accumulation, f32 epilogue.
        acc = jnp.dot(h, w, preferred_element_type=jnp.float32) + b
        if layer != num_layers - 1:
            # ReLU in f32; carry the inter-layer activation at the matmul dtype
            # to halve live bytes / vreg pressure (v7x has only 64 MiB VMEM).
            h = jnp.maximum(acc, 0.0).astype(matmul_dtype)
        else:
            h = acc
    o_ref[...] = h.astype(o_ref.dtype)


def _mlp_fused_call(padded_params, x_p, tm, dims_p, k0_p, out_dtype,
                    matmul_dtype, single_buffer_weights):
    m_p = x_p.shape[0]
    n_out_p = dims_p[-1][1]
    num_layers = len(padded_params)

    def resident_spec(shape):
        # Constant index map -> block is DMA'd once and stays resident across
        # all batch-grid steps; single-buffer it so weight VMEM isn't doubled.
        if single_buffer_weights:
            return pl.BlockSpec(shape, lambda i: (0, 0),
                                pipeline_mode=pl.Buffered(1))
        return pl.BlockSpec(shape, lambda i: (0, 0))

    in_specs = [pl.BlockSpec((tm, k0_p), lambda i: (i, 0))]
    flat_args = [x_p]
    for (w_p, b_p) in padded_params:
        in_specs.append(resident_spec(w_p.shape))
        in_specs.append(resident_spec(b_p.shape))
        flat_args.append(w_p)
        flat_args.append(b_p)
    out_spec = pl.BlockSpec((tm, n_out_p), lambda i: (i, 0))

    w_isz = jnp.dtype(matmul_dtype).itemsize
    x_isz = jnp.dtype(x_p.dtype).itemsize
    o_isz = jnp.dtype(out_dtype).itemsize

    flops = 2 * m_p * sum(k * n for k, n in dims_p)
    bytes_accessed = (m_p * k0_p * x_isz
                      + sum((k * n + n) * w_isz for k, n in dims_p)
                      + m_p * n_out_p * o_isz)
    est = _fused_vmem_estimate(tm, k0_p, dims_p, x_isz, w_isz, o_isz,
                               weight_bufs=1 if single_buffer_weights else 2)
    # Explicit scoped-VMEM limit (v5e default is only 16 MiB, v6e/v7x 32 MiB);
    # cap at 48 MiB to keep headroom under v7x's 64 MiB physical VMEM.
    vmem_limit = int(min(max(2 * est, 16 << 20), 48 << 20))

    kernel = functools.partial(_mlp_fused_kernel, num_layers=num_layers,
                               matmul_dtype=matmul_dtype)

    return pl.pallas_call(
        kernel,
        out_shape=jax.ShapeDtypeStruct((m_p, n_out_p), out_dtype),
        grid_spec=pltpu.PrefetchScalarGridSpec(
            num_scalar_prefetch=0,
            grid=(m_p // tm,),
            in_specs=in_specs,
            out_specs=out_spec,
            scratch_shapes=[],
        ),
        compiler_params=pltpu.CompilerParams(
            dimension_semantics=("parallel",),
            vmem_limit_bytes=vmem_limit,
        ),
        cost_estimate=pl.CostEstimate(flops=flops, transcendentals=0,
                                      bytes_accessed=bytes_accessed),
    )(*flat_args)


# ----------------------------------------------------------------------------
# Escape path for large MLPs: one tiled matmul kernel per layer (M,N,K grid),
# f32 accumulator scratch, fused bias + ReLU epilogue on the last K step.
# ----------------------------------------------------------------------------
def _linear_kernel(x_ref, w_ref, b_ref, o_ref, acc_ref, *, apply_relu):
    @pl.when(pl.program_id(2) == 0)
    def _():
        acc_ref[...] = jnp.zeros_like(acc_ref)

    acc_ref[...] += jnp.dot(x_ref[...], w_ref[...],
                            preferred_element_type=jnp.float32)

    @pl.when(pl.program_id(2) == pl.num_programs(2) - 1)
    def _():
        h = acc_ref[...] + b_ref[...].astype(jnp.float32)
        if apply_relu:
            h = jnp.maximum(h, 0.0)
        o_ref[...] = h.astype(o_ref.dtype)


def _linear_tiled_call(h, w, b, *, apply_relu, out_dtype):
    m_p, k_p = h.shape
    _, n_p = w.shape
    tm = _pick_tile(m_p, prefer_multiple_steps=True)
    tn = _pick_tile(n_p)
    tk = _pick_tile(k_p)
    grid = (m_p // tm, n_p // tn, k_p // tk)

    bytes_accessed = (h.size * h.dtype.itemsize + w.size * w.dtype.itemsize
                      + b.size * b.dtype.itemsize
                      + m_p * n_p * jnp.dtype(out_dtype).itemsize)

    return pl.pallas_call(
        functools.partial(_linear_kernel, apply_relu=apply_relu),
        out_shape=jax.ShapeDtypeStruct((m_p, n_p), out_dtype),
        grid_spec=pltpu.PrefetchScalarGridSpec(
            num_scalar_prefetch=0,
            grid=grid,
            in_specs=[
                pl.BlockSpec((tm, tk), lambda i, j, k: (i, k)),
                pl.BlockSpec((tk, tn), lambda i, j, k: (k, j)),
                pl.BlockSpec((1, tn), lambda i, j, k: (0, j)),
            ],
            out_specs=pl.BlockSpec((tm, tn), lambda i, j, k: (i, j)),
            scratch_shapes=[pltpu.VMEM((tm, tn), jnp.float32)],
        ),
        compiler_params=pltpu.CompilerParams(
            dimension_semantics=("parallel", "parallel", "arbitrary"),
            vmem_limit_bytes=48 << 20,
        ),
        cost_estimate=pl.CostEstimate(flops=2 * m_p * k_p * n_p,
                                      transcendentals=0,
                                      bytes_accessed=bytes_accessed),
    )(h, w, b)


# ----------------------------------------------------------------------------
# Public wrapper
# ----------------------------------------------------------------------------
def mlp_forward(params, x, *, matmul_dtype=jnp.bfloat16, force_tiled=False):
    """Forward pass of the MLP.

    params: list of (w, b) with w:(K_l, N_l), b:(1, N_l) (already transposed
    from torch's (out,in) layout); x:(M, K_0). Returns (M, N_last) in x.dtype.
    """
    M, K0 = x.shape
    num_layers = len(params)
    assert params[0][0].shape[0] == K0
    n_out = params[-1][0].shape[1]
    out_dtype = x.dtype

    # ---- pad EVERY layer dim (K_l, N_l) to a multiple of 128 (lane-dense
    # matmuls / unmasked stores) and pre-cast weights+biases to the matmul
    # dtype once in HBM (halves weight DMA & VMEM, no per-step kernel casts).
    # Zero padding is exact through matmul + bias(0) + ReLU.
    k0_p = _round_up(K0, 128)
    padded, dims_p = [], []
    for (w, b) in params:
        k, n = w.shape
        k_p, n_p = _round_up(k, 128), _round_up(n, 128)
        w_p = jnp.pad(w, ((0, k_p - k), (0, n_p - n))).astype(matmul_dtype)
        b_p = jnp.pad(b, ((0, 0), (0, n_p - n))).astype(matmul_dtype)
        padded.append((w_p, b_p))
        dims_p.append((k_p, n_p))

    # ---- pad the batch so it always tiles into aligned blocks (no single
    # full-extent fallback that would kill pipelining / megacore sharding).
    m_p = _round_up(M, 128) if M >= 128 else _round_up(M, 8)
    x_p = x
    if (m_p, k0_p) != (M, K0):
        x_p = jnp.pad(x, ((0, m_p - M), (0, k0_p - K0)))

    tm = _pick_tile(m_p, prefer_multiple_steps=True)

    x_isz = jnp.dtype(x_p.dtype).itemsize
    w_isz = jnp.dtype(matmul_dtype).itemsize
    o_isz = jnp.dtype(out_dtype).itemsize
    fits = _fused_vmem_estimate(tm, k0_p, dims_p, x_isz, w_isz, o_isz,
                                weight_bufs=1) <= _WEIGHT_RESIDENCY_BUDGET

    if fits and not force_tiled:
        try:
            y = _mlp_fused_call(padded, x_p, tm, dims_p, k0_p, out_dtype,
                                matmul_dtype, single_buffer_weights=True)
        except Exception:
            # This jax version rejected pipeline_mode=pl.Buffered(1); retry
            # with default (double-buffered) weight blocks.
            y = _mlp_fused_call(padded, x_p, tm, dims_p, k0_p, out_dtype,
                                matmul_dtype, single_buffer_weights=False)
    else:
        # Weights don't fit the VMEM residency budget: per-layer tiled matmuls.
        h = x_p.astype(matmul_dtype)
        for layer, (w_p, b_p) in enumerate(padded):
            last = layer == num_layers - 1
            h = _linear_tiled_call(h, w_p, b_p,
                                   apply_relu=not last,
                                   out_dtype=out_dtype if last else matmul_dtype)
        y = h

    return y[:M, :n_out]


# ----------------------------------------------------------------------------
# Parameter construction (mimics torch.nn.Linear default init) + JAX reference.
# ----------------------------------------------------------------------------
def init_mlp_params(key, in_channels, hidden_channels, out_channels, num_layers):
    dims = []
    l1_out = hidden_channels if num_layers > 1 else out_channels
    dims.append((in_channels, l1_out))
    for i in range(num_layers - 1):
        out_dim = hidden_channels if i != num_layers - 2 else out_channels
        dims.append((hidden_channels, out_dim))

    params = []
    for (fan_in, fan_out) in dims:
        key, kw, kb = jax.random.split(key, 3)
        bound = 1.0 / jnp.sqrt(jnp.float32(fan_in))
        # stored already transposed: (in, out)
        w = jax.random.uniform(kw, (fan_in, fan_out), jnp.float32, -bound, bound)
        b = jax.random.uniform(kb, (1, fan_out), jnp.float32, -bound, bound)
        params.append((w, b))
    return params


def mlp_forward_ref(params, x, matmul_dtype=jnp.float32):
    """Pure-JAX reference mirroring the kernel's dtype strategy."""
    n = len(params)
    h = x.astype(matmul_dtype)
    for idx, (w, b) in enumerate(params):
        h = (jnp.dot(h, w.astype(matmul_dtype),
                     preferred_element_type=jnp.float32)
             + b.astype(matmul_dtype))
        if idx != n - 1:
            h = jnp.maximum(h, 0.0).astype(matmul_dtype)
    return h.astype(x.dtype)


if __name__ == "__main__":
    # MLP(in_channels=128, hidden_channels=256, out_channels=64, num_layers=3)
    in_channels, hidden_channels, out_channels, num_layers = 128, 256, 64, 3
    batch = 256   # pads/tiles to tm=128 -> 2 "parallel" grid steps

    key = jax.random.PRNGKey(0)
    key, kx = jax.random.split(key)
    x = jax.random.normal(kx, (batch, in_channels), jnp.float32)
    params = init_mlp_params(key, in_channels, hidden_channels,
                             out_channels, num_layers)

    # Fast path: fused single kernel, bf16 MXU operands, f32 accumulation.
    y = jax.block_until_ready(mlp_forward(params, x))
    assert y.shape == (batch, out_channels)
    y_ref16 = mlp_forward_ref(params, x, matmul_dtype=jnp.bfloat16)
    assert jnp.allclose(y, y_ref16, atol=1e-2, rtol=1e-2), "bf16 fused mismatch"

    # Exact path: f32 matmuls vs the plain f32 reference (tight tolerance).
    y32 = jax.block_until_ready(mlp_forward(params, x, matmul_dtype=jnp.float32))
    y_ref32 = mlp_forward_ref(params, x, matmul_dtype=jnp.float32)
    assert jnp.allclose(y32, y_ref32, atol=1e-4, rtol=1e-4), "f32 fused mismatch"

    # Escape path (per-layer tiled matmul) -- exercised here so it stays tested.
    y_tiled = jax.block_until_ready(mlp_forward(params, x, force_tiled=True))
    assert jnp.allclose(y_tiled, y_ref16, atol=1e-2, rtol=1e-2), "tiled mismatch"

    print("KERNEL_OK")
</pallas_src>

<mosaic_0001>
module attributes {stable_mosaic.version = 11 : i64} {
  func.func @_mlp_fused_kernel(%arg0: i32, %arg1: memref<128x128xf32, #tpu.memory_space<vmem>>, %arg2: memref<128x256xbf16, #tpu.memory_space<vmem>>, %arg3: memref<1x256xbf16, #tpu.memory_space<vmem>>, %arg4: memref<256x256xbf16, #tpu.memory_space<vmem>>, %arg5: memref<1x256xbf16, #tpu.memory_space<vmem>>, %arg6: memref<256x128xbf16, #tpu.memory_space<vmem>>, %arg7: memref<1x128xbf16, #tpu.memory_space<vmem>>, %arg8: memref<128x128xf32, #tpu.memory_space<vmem>>) attributes {dimension_semantics = [#tpu.dimension_semantics<parallel>], iteration_bounds = array<i64: 2>, scalar_prefetch = 0 : i64, scratch_operands = 0 : i64, tpu.core_type = #tpu.core_type<tc>, window_params = [{transform_indices = @transform_0, window_bounds = array<i64: 128, 128>}, {pipeline_mode = #tpu.pipeline_mode<synchronous>, transform_indices = @transform_1, window_bounds = array<i64: 128, 256>}, {pipeline_mode = #tpu.pipeline_mode<synchronous>, transform_indices = @transform_2, window_bounds = array<i64: 1, 256>}, {pipeline_mode = #tpu.pipeline_mode<synchronous>, transform_indices = @transform_3, window_bounds = array<i64: 256, 256>}, {pipeline_mode = #tpu.pipeline_mode<synchronous>, transform_indices = @transform_4, window_bounds = array<i64: 1, 256>}, {pipeline_mode = #tpu.pipeline_mode<synchronous>, transform_indices = @transform_5, window_bounds = array<i64: 256, 128>}, {pipeline_mode = #tpu.pipeline_mode<synchronous>, transform_indices = @transform_6, window_bounds = array<i64: 1, 128>}, {transform_indices = @transform_7, window_bounds = array<i64: 128, 128>}]} {
    %c0 = arith.constant 0 : index
    %c0_0 = arith.constant 0 : index
    %0 = vector.load %arg1[%c0, %c0_0] : memref<128x128xf32, #tpu.memory_space<vmem>>, vector<128x128xf32>
    %1 = arith.truncf %0 : vector<128x128xf32> to vector<128x128xbf16>
    %c0_1 = arith.constant 0 : index
    %c0_2 = arith.constant 0 : index
    %2 = vector.load %arg2[%c0_1, %c0_2] : memref<128x256xbf16, #tpu.memory_space<vmem>>, vector<128x256xbf16>
    %c0_3 = arith.constant 0 : index
    %c0_4 = arith.constant 0 : index
    %3 = vector.load %arg3[%c0_3, %c0_4] : memref<1x256xbf16, #tpu.memory_space<vmem>>, vector<1x256xbf16>
    %cst = arith.constant dense<0.000000e+00> : vector<128x256xf32>
    %4 = tpu.matmul %1, %2, %cst {dimension_numbers = #tpu.dot_dimension_numbers<[1], [0], [0], [1], [0, 0, 1, 1], [], []>} : vector<128x128xbf16>, vector<128x256xbf16>, vector<128x256xf32> -> vector<128x256xf32>
    %5 = arith.extf %3 : vector<1x256xbf16> to vector<1x256xf32>
    %6 = vector.broadcast %5 : vector<1x256xf32> to vector<128x256xf32>
    %7 = arith.addf %4, %6 : vector<128x256xf32>
    %cst_5 = arith.constant 0.000000e+00 : f32
    %8 = vector.broadcast %cst_5 : f32 to vector<128x256xf32>
    %9 = arith.maximumf %7, %8 : vector<128x256xf32>
    %10 = arith.truncf %9 : vector<128x256xf32> to vector<128x256xbf16>
    %c0_6 = arith.constant 0 : index
    %c0_7 = arith.constant 0 : index
    %11 = vector.load %arg4[%c0_6, %c0_7] : memref<256x256xbf16, #tpu.memory_space<vmem>>, vector<256x256xbf16>
    %c0_8 = arith.constant 0 : index
    %c0_9 = arith.constant 0 : index
    %12 = vector.load %arg5[%c0_8, %c0_9] : memref<1x256xbf16, #tpu.memory_space<vmem>>, vector<1x256xbf16>
    %cst_10 = arith.constant dense<0.000000e+00> : vector<128x256xf32>
    %13 = tpu.matmul %10, %11, %cst_10 {dimension_numbers = #tpu.dot_dimension_numbers<[1], [0], [0], [1], [0, 0, 1, 1], [], []>} : vector<128x256xbf16>, vector<256x256xbf16>, vector<128x256xf32> -> vector<128x256xf32>
    %14 = arith.extf %12 : vector<1x256xbf16> to vector<1x256xf32>
    %15 = vector.broadcast %14 : vector<1x256xf32> to vector<128x256xf32>
    %16 = arith.addf %13, %15 : vector<128x256xf32>
    %cst_11 = arith.constant 0.000000e+00 : f32
    %17 = vector.broadcast %cst_11 : f32 to vector<128x256xf32>
    %18 = arith.maximumf %16, %17 : vector<128x256xf32>
    %19 = arith.truncf %18 : vector<128x256xf32> to vector<128x256xbf16>
    %c0_12 = arith.constant 0 : index
    %c0_13 = arith.constant 0 : index
    %20 = vector.load %arg6[%c0_12, %c0_13] : memref<256x128xbf16, #tpu.memory_space<vmem>>, vector<256x128xbf16>
    %c0_14 = arith.constant 0 : index
    %c0_15 = arith.constant 0 : index
    %21 = vector.load %arg7[%c0_14, %c0_15] : memref<1x128xbf16, #tpu.memory_space<vmem>>, vector<1x128xbf16>
    %cst_16 = arith.constant dense<0.000000e+00> : vector<128x128xf32>
    %22 = tpu.matmul %19, %20, %cst_16 {dimension_numbers = #tpu.dot_dimension_numbers<[1], [0], [0], [1], [0, 0, 1, 1], [], []>} : vector<128x256xbf16>, vector<256x128xbf16>, vector<128x128xf32> -> vector<128x128xf32>
    %23 = arith.extf %21 : vector<1x128xbf16> to vector<1x128xf32>
    %24 = vector.broadcast %23 : vector<1x128xf32> to vector<128x128xf32>
    %25 = arith.addf %22, %24 : vector<128x128xf32>
    %c0_17 = arith.constant 0 : index
    %c0_18 = arith.constant 0 : index
    %26 = vector.load %arg8[%c0_17, %c0_18] : memref<128x128xf32, #tpu.memory_space<vmem>>, vector<128x128xf32>
    tpu.vector_store %arg8[%c0_17, %c0_18], %25 {strides = array<i32>} : memref<128x128xf32, #tpu.memory_space<vmem>>, vector<128x128xf32>,
    return
  }
  func.func @transform_0(%arg0: i32) -> (i32, i32) {
    %c0_i32 = arith.constant 0 : i32
    %c0_i32_0 = arith.constant 0 : i32
    return %arg0, %c0_i32 : i32, i32
  }
  func.func @transform_1(%arg0: i32) -> (i32, i32) {
    %c0_i32 = arith.constant 0 : i32
    %c0_i32_0 = arith.constant 0 : i32
    %c0_i32_1 = arith.constant 0 : i32
    return %c0_i32, %c0_i32_0 : i32, i32
  }
  func.func @transform_2(%arg0: i32) -> (i32, i32) {
    %c0_i32 = arith.constant 0 : i32
    %c0_i32_0 = arith.constant 0 : i32
    %c0_i32_1 = arith.constant 0 : i32
    return %c0_i32, %c0_i32_0 : i32, i32
  }
  func.func @transform_3(%arg0: i32) -> (i32, i32) {
    %c0_i32 = arith.constant 0 : i32
    %c0_i32_0 = arith.constant 0 : i32
    %c0_i32_1 = arith.constant 0 : i32
    return %c0_i32, %c0_i32_0 : i32, i32
  }
  func.func @transform_4(%arg0: i32) -> (i32, i32) {
    %c0_i32 = arith.constant 0 : i32
    %c0_i32_0 = arith.constant 0 : i32
    %c0_i32_1 = arith.constant 0 : i32
    return %c0_i32, %c0_i32_0 : i32, i32
  }
  func.func @transform_5(%arg0: i32) -> (i32, i32) {
    %c0_i32 = arith.constant 0 : i32
    %c0_i32_0 = arith.constant 0 : i32
    %c0_i32_1 = arith.constant 0 : i32
    return %c0_i32, %c0_i32_0 : i32, i32
  }
  func.func @transform_6(%arg0: i32) -> (i32, i32) {
    %c0_i32 = arith.constant 0 : i32
    %c0_i32_0 = arith.constant 0 : i32
    %c0_i32_1 = arith.constant 0 : i32
    return %c0_i32, %c0_i32_0 : i32, i32
  }
  func.func @transform_7(%arg0: i32) -> (i32, i32) {
    %c0_i32 = arith.constant 0 : i32
    %c0_i32_0 = arith.constant 0 : i32
    return %arg0, %c0_i32 : i32, i32
  }
}

module attributes {stable_mosaic.version = 11 : i64} {
  func.func @_mlp_fused_kernel(%arg0: i32, %arg1: memref<128x128xf32, #tpu.memory_space<vmem>>, %arg2: memref<128x256xbf16, #tpu.memory_space<vmem>>, %arg3: memref<1x256xbf16, #tpu.memory_space<vmem>>, %arg4: memref<256x256xbf16, #tpu.memory_space<vmem>>, %arg5: memref<1x256xbf16, #tpu.memory_space<vmem>>, %arg6: memref<256x128xbf16, #tpu.memory_space<vmem>>, %arg7: memref<1x128xbf16, #tpu.memory_space<vmem>>, %arg8: memref<128x128xf32, #tpu.memory_space<vmem>>) attributes {dimension_semantics = [#tpu.dimension_semantics<parallel>], iteration_bounds = array<i64: 2>, scalar_prefetch = 0 : i64, scratch_operands = 0 : i64, tpu.core_type = #tpu.core_type<tc>, window_params = [{transform_indices = @transform_0, window_bounds = array<i64: 128, 128>}, {pipeline_mode = #tpu.pipeline_mode<synchronous>, transform_indices = @transform_1, window_bounds = array<i64: 128, 256>}, {pipeline_mode = #tpu.pipeline_mode<synchronous>, transform_indices = @transform_2, window_bounds = array<i64: 1, 256>}, {pipeline_mode = #tpu.pipeline_mode<synchronous>, transform_indices = @transform_3, window_bounds = array<i64: 256, 256>}, {pipeline_mode = #tpu.pipeline_mode<synchronous>, transform_indices = @transform_4, window_bounds = array<i64: 1, 256>}, {pipeline_mode = #tpu.pipeline_mode<synchronous>, transform_indices = @transform_5, window_bounds = array<i64: 256, 128>}, {pipeline_mode = #tpu.pipeline_mode<synchronous>, transform_indices = @transform_6, window_bounds = array<i64: 1, 128>}, {transform_indices = @transform_7, window_bounds = array<i64: 128, 128>}]} {
    %c0 = arith.constant 0 : index
    %c0_0 = arith.constant 0 : index
    %0 = vector.load %arg1[%c0, %c0_0] : memref<128x128xf32, #tpu.memory_space<vmem>>, vector<128x128xf32>
    %1 = arith.truncf %0 : vector<128x128xf32> to vector<128x128xbf16>
    %c0_1 = arith.constant 0 : index
    %c0_2 = arith.constant 0 : index
    %2 = vector.load %arg2[%c0_1, %c0_2] : memref<128x256xbf16, #tpu.memory_space<vmem>>, vector<128x256xbf16>
    %c0_3 = arith.constant 0 : index
    %c0_4 = arith.constant 0 : index
    %3 = vector.load %arg3[%c0_3, %c0_4] : memref<1x256xbf16, #tpu.memory_space<vmem>>, vector<1x256xbf16>
    %cst = arith.constant dense<0.000000e+00> : vector<128x256xf32>
    %4 = tpu.matmul %1, %2, %cst {dimension_numbers = #tpu.dot_dimension_numbers<[1], [0], [0], [1], [0, 0, 1, 1], [], []>} : vector<128x128xbf16>, vector<128x256xbf16>, vector<128x256xf32> -> vector<128x256xf32>
    %5 = arith.extf %3 : vector<1x256xbf16> to vector<1x256xf32>
    %6 = vector.broadcast %5 : vector<1x256xf32> to vector<128x256xf32>
    %7 = arith.addf %4, %6 : vector<128x256xf32>
    %cst_5 = arith.constant 0.000000e+00 : f32
    %8 = vector.broadcast %cst_5 : f32 to vector<128x256xf32>
    %9 = arith.maximumf %7, %8 : vector<128x256xf32>
    %10 = arith.truncf %9 : vector<128x256xf32> to vector<128x256xbf16>
    %c0_6 = arith.constant 0 : index
    %c0_7 = arith.constant 0 : index
    %11 = vector.load %arg4[%c0_6, %c0_7] : memref<256x256xbf16, #tpu.memory_space<vmem>>, vector<256x256xbf16>
    %c0_8 = arith.constant 0 : index
    %c0_9 = arith.constant 0 : index
    %12 = vector.load %arg5[%c0_8, %c0_9] : memref<1x256xbf16, #tpu.memory_space<vmem>>, vector<1x256xbf16>
    %cst_10 = arith.constant dense<0.000000e+00> : vector<128x256xf32>
    %13 = tpu.matmul %10, %11, %cst_10 {dimension_numbers = #tpu.dot_dimension_numbers<[1], [0], [0], [1], [0, 0, 1, 1], [], []>} : vector<128x256xbf16>, vector<256x256xbf16>, vector<128x256xf32> -> vector<128x256xf32>
    %14 = arith.extf %12 : vector<1x256xbf16> to vector<1x256xf32>
    %15 = vector.broadcast %14 : vector<1x256xf32> to vector<128x256xf32>
    %16 = arith.addf %13, %15 : vector<128x256xf32>
    %cst_11 = arith.constant 0.000000e+00 : f32
    %17 = vector.broadcast %cst_11 : f32 to vector<128x256xf32>
    %18 = arith.maximumf %16, %17 : vector<128x256xf32>
    %19 = arith.truncf %18 : vector<128x256xf32> to vector<128x256xbf16>
    %c0_12 = arith.constant 0 : index
    %c0_13 = arith.constant 0 : index
    %20 = vector.load %arg6[%c0_12, %c0_13] : memref<256x128xbf16, #tpu.memory_space<vmem>>, vector<256x128xbf16>
    %c0_14 = arith.constant 0 : index
    %c0_15 = arith.constant 0 : index
    %21 = vector.load %arg7[%c0_14, %c0_15] : memref<1x128xbf16, #tpu.memory_space<vmem>>, vector<1x128xbf16>
    %cst_16 = arith.constant dense<0.000000e+00> : vector<128x128xf32>
    %22 = tpu.matmul %19, %20, %cst_16 {dimension_numbers = #tpu.dot_dimension_numbers<[1], [0], [0], [1], [0, 0, 1, 1], [], []>} : vector<128x256xbf16>, vector<256x128xbf16>, vector<128x128xf32> -> vector<128x128xf32>
    %23 = arith.extf %21 : vector<1x128xbf16> to vector<1x128xf32>
    %24 = vector.broadcast %23 : vector<1x128xf32> to vector<128x128xf32>
    %25 = arith.addf %22, %24 : vector<128x128xf32>
    %c0_17 = arith.constant 0 : index
    %c0_18 = arith.constant 0 : index
    %26 = vector.load %arg8[%c0_17, %c0_18] : memref<128x128xf32, #tpu.memory_space<vmem>>, vector<128x128xf32>
    tpu.vector_store %arg8[%c0_17, %c0_18], %25 {strides = array<i32>} : memref<128x128xf32, #tpu.memory_space<vmem>>, vector<128x128xf32>,
    return
  }
  func.func @transform_0(%arg0: i32) -> (i32, i32) {
    %c0_i32 = arith.constant 0 : i32
    %c0_i32_0 = arith.constant 0 : i32
    return %arg0, %c0_i32 : i32, i32
  }
  func.func @transform_1(%arg0: i32) -> (i32, i32) {
    %c0_i32 = arith.constant 0 : i32
    %c0_i32_0 = arith.constant 0 : i32
    %c0_i32_1 = arith.constant 0 : i32
    return %c0_i32, %c0_i32_0 : i32, i32
  }
  func.func @transform_2(%arg0: i32) -> (i32, i32) {
    %c0_i32 = arith.constant 0 : i32
    %c0_i32_0 = arith.constant 0 : i32
    %c0_i32_1 = arith.constant 0 : i32
    return %c0_i32, %c0_i32_0 : i32, i32
  }
  func.func @transform_3(%arg0: i32) -> (i32, i32) {
    %c0_i32 = arith.constant 0 : i32
    %c0_i32_0 = arith.constant 0 : i32
    %c0_i32_1 = arith.constant 0 : i32
    return %c0_i32, %c0_i32_0 : i32, i32
  }
  func.func @transform_4(%arg0: i32) -> (i32, i32) {
    %c0_i32 = arith.constant 0 : i32
    %c0_i32_0 = arith.constant 0 : i32
    %c0_i32_1 = arith.constant 0 : i32
    return %c0_i32, %c0_i32_0 : i32, i32
  }
  func.func @transform_5(%arg0: i32) -> (i32, i32) {
    %c0_i32 = arith.constant 0 : i32
    %c0_i32_0 = arith.constant 0 : i32
    %c0_i32_1 = arith.constant 0 : i32
    return %c0_i32, %c0_i32_0 : i32, i32
  }
  func.func @transform_6(%arg0: i32) -> (i32, i32) {
    %c0_i32 = arith.constant 0 : i32
    %c0_i32_0 = arith.constant 0 : i32
    %c0_i32_1 = arith.constant 0 : i32
    return %c0_i32, %c0_i32_0 : i32, i32
  }
  func.func @transform_7(%arg0: i32) -> (i32, i32) {
    %c0_i32 = arith.constant 0 : i32
    %c0_i32_0 = arith.constant 0 : i32
    return %arg0, %c0_i32 : i32, i32
  }
}

</mosaic_0001>

<llo_original>
// kernel: tpu_custom_call.1
$region0: #{tpu_custom_call.1}
  #allocation0 [shape = 'u32[]', space=smem, size = 0x4, offset = 0x4, fixed_abs, tag = 'smem constant byte address 0x4 - core index']
  #allocation1 [shape = 'u32[144,128]{1,0:T(1,128)}', space=vmem, size = 0x12000, scoped, tag = 'internal scratch']
  %s0 = inlined_call_operand.hbm [shape: f32[256,128], index: 0, kind: input, shape index: {}]
  %s1 = inlined_call_operand.hbm [shape: bf16[128,256], index: 1, kind: input, shape index: {}]
  %s2 = inlined_call_operand.vmem [shape: bf16[1,256], index: 2, kind: input, shape index: {}]
  %s3 = inlined_call_operand.hbm [shape: bf16[256,256], index: 3, kind: input, shape index: {}]
  %s4 = inlined_call_operand.vmem [shape: bf16[1,256], index: 4, kind: input, shape index: {}]
  %s5 = inlined_call_operand.hbm [shape: bf16[256,128], index: 5, kind: input, shape index: {}]
  %s6 = inlined_call_operand.vmem [shape: bf16[1,128], index: 6, kind: input, shape index: {}]
  %s7 = inlined_call_operand.hbm [shape: f32[256,128], index: 7, kind: output, shape index: {}]
  %s8 = sld [smem:[#allocation0]]
  $region77: #{tpu_custom_call.1} parent=0
    _
  %s10 = ssub.s32 1, %s8
  %s11 = scalar_select 0, %s10, %s8
  $region1: #{tpu_custom_call.1} parent=0
    #allocation2 [shape = 'u8[131072]{0}', space=vmem, size = 0x20000, scoped, tag = 'input window, operand 0']
    #allocation3 [shape = 's32[2]{0}', space=sflag, size = 0x8, scoped, tag = 'scoped memory for tpu_custom_call.1']
    #allocation4 [shape = 's32[2]{0}', space=sflag, size = 0x8, scoped, tag = 'scoped memory for tpu_custom_call.1']
    #allocation5 [shape = 'u8[65536]{0}', space=vmem, size = 0x10000, scoped, tag = 'input window, operand 1, single buffered']
    #allocation6 [shape = 's32[1]{0}', space=sflag, size = 0x4, scoped, tag = 'scoped memory for tpu_custom_call.1']
    #allocation7 [shape = 'u8[131072]{0}', space=vmem, size = 0x20000, scoped, tag = 'input window, operand 3, single buffered']
    #allocation8 [shape = 'u8[65536]{0}', space=vmem, size = 0x10000, scoped, tag = 'input window, operand 5, single buffered']
    #allocation9 [shape = 's32[1]{0}', space=sflag, size = 0x4, scoped, tag = 'scoped memory for tpu_custom_call.1']
    #allocation10 [shape = 'u8[131072]{0}', space=vmem, size = 0x20000, scoped, tag = 'output window, operand 0']
    %12 = vsyncpa [#allocation3], 0
    %s13 = scalar_lea.sflag [#allocation3], 1
    %14 = vsyncpa %s13, 0
    %15 = vsyncpa [#allocation6], 0
    %16 = vsyncpa [#allocation9], 0
    %17 = vsyncpa [#allocation4], 0
    %s18 = scalar_lea.sflag [#allocation4], 1
    %19 = vsyncpa %s18, 0
    loop: start=0, step=1, limit=4
    $region2: #{tpu_custom_call.1} parent=1 // loop_pre_header
      _
    $region3: #{tpu_custom_call.1} parent=1 // loop_header
      %s21 = sphi 0, %s25
      %p22 = scmp.ge.s32.totalorder %s21, 4
      %s31 = sphi 0, %s33
      %s34 = sphi 0, %s31
      %s35 = sphi 0, %s34
      %s51 = sphi 0, %s35
      %s55 = sphi 0, %s55
      %s57 = sphi 0, %s55
      %s58 = sphi 0, %s57
      %s72 = sphi 0, %s58
      %s76 = sphi 0, %s76
      %s78 = sphi 0, %s76
      %s79 = sphi 0, %s78
      %s93 = sphi 0, %s79
      %s97 = sphi 0, %s97
      %s99 = sphi 0, %s97
      %s100 = sphi 0, %s99
      %s114 = sphi 0, %s100
      %s118 = sphi 0, %s118
      %s120 = sphi 0, %s118
      %s121 = sphi 0, %s120
      %s135 = sphi 0, %s121
      %s139 = sphi 0, %s139
      %s141 = sphi 0, %s139
      %s142 = sphi 0, %s141
      %s156 = sphi 0, %s142
      %s160 = sphi 0, %s160
      %s162 = sphi 0, %s160
      %s163 = sphi 0, %s162
      %s177 = sphi 0, %s163
      %s183 = sphi 0, %s185
      %s186 = sphi 0, %s183
      %s187 = sphi 0, %s186
      %s203 = sphi 0, %s187
    $region4: #{tpu_custom_call.1} parent=1 // loop_header_branch
      %24 = sbr.rel (%p22) target = $region8
    $region5: #{tpu_custom_call.1} parent=1 // loop_body
      %s26 = ssub.s32 %s21, 1
      %s27 = ssub.s32 %s21, 2
      %s28 = sadd.s32 %s21, 1
      %s29 = ssub.s32 %s21, %s28
      %p30 = scmp.eq.s32.totalorder %s29, 0
      %s32 = sadd.s32 %s31, 1
      %s33 = scalar_select %p30, %s31, %s32
      %p36 = pneg %p30
      %p37 = scmp.eq.s32.totalorder %s21, 1
      %p38 = por %p36, %p37
      %p39 = scmp.ne.s32.totalorder %s31, %s34
      %p40 = scmp.eq.s32.totalorder %s21, 0
      %p41 = por %p39, %p40
      %p42 = scmp.ne.s32.totalorder %s31, %s34
      %p43 = scmp.eq.s32.totalorder %s26, 1
      %p44 = por %p42, %p43
      %p45 = scmp.ne.s32.totalorder %s34, %s35
      %p46 = scmp.eq.s32.totalorder %s26, 0
      %p47 = por %p45, %p46
      %p48 = scmp.ne.s32.totalorder %s34, %s35
      %p49 = scmp.eq.s32.totalorder %s27, 1
      %p50 = por %p48, %p49
      %p52 = scmp.ne.s32.totalorder %s35, %s51
      %p53 = scmp.eq.s32.totalorder %s27, 0
      %p54 = por %p52, %p53
      %s56 = sadd.s32 %s55, 1
      %p59 = scmp.eq.s32.totalorder %s21, 1
      %p60 = scmp.ne.s32.totalorder %s55, %s57
      %p61 = scmp.eq.s32.totalorder %s21, 0
      %p62 = por %p60, %p61
      %p63 = scmp.ne.s32.totalorder %s55, %s57
      %p64 = scmp.eq.s32.totalorder %s26, 1
      %p65 = por %p63, %p64
      %p66 = scmp.ne.s32.totalorder %s57, %s58
      %p67 = scmp.eq.s32.totalorder %s26, 0
      %p68 = por %p66, %p67
      %p69 = scmp.ne.s32.totalorder %s57, %s58
      %p70 = scmp.eq.s32.totalorder %s27, 1
      %p71 = por %p69, %p70
      %p73 = scmp.ne.s32.totalorder %s58, %s72
      %p74 = scmp.eq.s32.totalorder %s27, 0
      %p75 = por %p73, %p74
      %s77 = sadd.s32 %s76, 1
      %p80 = scmp.eq.s32.totalorder %s21, 1
      %p81 = scmp.ne.s32.totalorder %s76, %s78
      %p82 = scmp.eq.s32.totalorder %s21, 0
      %p83 = por %p81, %p82
      %p84 = scmp.ne.s32.totalorder %s76, %s78
      %p85 = scmp.eq.s32.totalorder %s26, 1
      %p86 = por %p84, %p85
      %p87 = scmp.ne.s32.totalorder %s78, %s79
      %p88 = scmp.eq.s32.totalorder %s26, 0
      %p89 = por %p87, %p88
      %p90 = scmp.ne.s32.totalorder %s78, %s79
      %p91 = scmp.eq.s32.totalorder %s27, 1
      %p92 = por %p90, %p91
      %p94 = scmp.ne.s32.totalorder %s79, %s93
      %p95 = scmp.eq.s32.totalorder %s27, 0
      %p96 = por %p94, %p95
      %s98 = sadd.s32 %s97, 1
      %p101 = scmp.eq.s32.totalorder %s21, 1
      %p102 = scmp.ne.s32.totalorder %s97, %s99
      %p103 = scmp.eq.s32.totalorder %s21, 0
      %p104 = por %p102, %p103
      %p105 = scmp.ne.s32.totalorder %s97, %s99
      %p106 = scmp.eq.s32.totalorder %s26, 1
      %p107 = por %p105, %p106
      %p108 = scmp.ne.s32.totalorder %s99, %s100
      %p109 = scmp.eq.s32.totalorder %s26, 0
      %p110 = por %p108, %p109
      %p111 = scmp.ne.s32.totalorder %s99, %s100
      %p112 = scmp.eq.s32.totalorder %s27, 1
      %p113 = por %p111, %p112
      %p115 = scmp.ne.s32.totalorder %s100, %s114
      %p116 = scmp.eq.s32.totalorder %s27, 0
      %p117 = por %p115, %p116
      %s119 = sadd.s32 %s118, 1
      %p122 = scmp.eq.s32.totalorder %s21, 1
      %p123 = scmp.ne.s32.totalorder %s118, %s120
      %p124 = scmp.eq.s32.totalorder %s21, 0
      %p125 = por %p123, %p124
      %p126 = scmp.ne.s32.totalorder %s118, %s120
      %p127 = scmp.eq.s32.totalorder %s26, 1
      %p128 = por %p126, %p127
      %p129 = scmp.ne.s32.totalorder %s120, %s121
      %p130 = scmp.eq.s32.totalorder %s26, 0
      %p131 = por %p129, %p130
      %p132 = scmp.ne.s32.totalorder %s120, %s121
      %p133 = scmp.eq.s32.totalorder %s27, 1
      %p134 = por %p132, %p133
      %p136 = scmp.ne.s32.totalorder %s121, %s135
      %p137 = scmp.eq.s32.totalorder %s27, 0
      %p138 = por %p136, %p137
      %s140 = sadd.s32 %s139, 1
      %p143 = scmp.eq.s32.totalorder %s21, 1
      %p144 = scmp.ne.s32.totalorder %s139, %s141
      %p145 = scmp.eq.s32.totalorder %s21, 0
      %p146 = por %p144, %p145
      %p147 = scmp.ne.s32.totalorder %s139, %s141
      %p148 = scmp.eq.s32.totalorder %s26, 1
      %p149 = por %p147, %p148
      %p150 = scmp.ne.s32.totalorder %s141, %s142
      %p151 = scmp.eq.s32.totalorder %s26, 0
      %p152 = por %p150, %p151
      %p153 = scmp.ne.s32.totalorder %s141, %s142
      %p154 = scmp.eq.s32.totalorder %s27, 1
      %p155 = por %p153, %p154
      %p157 = scmp.ne.s32.totalorder %s142, %s156
      %p158 = scmp.eq.s32.totalorder %s27, 0
      %p159 = por %p157, %p158
      %s161 = sadd.s32 %s160, 1
      %p164 = scmp.eq.s32.totalorder %s21, 1
      %p165 = scmp.ne.s32.totalorder %s160, %s162
      %p166 = scmp.eq.s32.totalorder %s21, 0
      %p167 = por %p165, %p166
      %p168 = scmp.ne.s32.totalorder %s160, %s162
      %p169 = scmp.eq.s32.totalorder %s26, 1
      %p170 = por %p168, %p169
      %p171 = scmp.ne.s32.totalorder %s162, %s163
      %p172 = scmp.eq.s32.totalorder %s26, 0
      %p173 = por %p171, %p172
      %p174 = scmp.ne.s32.totalorder %s162, %s163
      %p175 = scmp.eq.s32.totalorder %s27, 1
      %p176 = por %p174, %p175
      %p178 = scmp.ne.s32.totalorder %s163, %s177
      %p179 = scmp.eq.s32.totalorder %s27, 0
      %p180 = por %p178, %p179
      %s181 = ssub.s32 %s21, %s28
      %p182 = scmp.eq.s32.totalorder %s181, 0
      %s184 = sadd.s32 %s183, 1
      %s185 = scalar_select %p182, %s183, %s184
      %p188 = pneg %p182
      %p189 = scmp.eq.s32.totalorder %s21, 1
      %p190 = por %p188, %p189
      %p191 = scmp.ne.s32.totalorder %s183, %s186
      %p192 = scmp.eq.s32.totalorder %s21, 0
      %p193 = por %p191, %p192
      %p194 = scmp.ne.s32.totalorder %s183, %s186
      %p195 = scmp.eq.s32.totalorder %s26, 1
      %p196 = por %p194, %p195
      %p197 = scmp.ne.s32.totalorder %s186, %s187
      %p198 = scmp.eq.s32.totalorder %s26, 0
      %p199 = por %p197, %p198
      %p200 = scmp.ne.s32.totalorder %s186, %s187
      %p201 = scmp.eq.s32.totalorder %s27, 1
      %p202 = por %p200, %p201
      %p204 = scmp.ne.s32.totalorder %s187, %s203
      %p205 = scmp.eq.s32.totalorder %s27, 0
      %p206 = por %p204, %p205
      %p207 = scmp.le.s32.totalorder 1, %s21
      %p208 = scmp.lt.s32.totalorder %s21, 3
      %p209 = pnand %p207, %p208
      %p210 = pneg %p209
      // Predicated region
      $region9: #{tpu_custom_call.1} parent=5 // pred_check
        _
      $region10: #{tpu_custom_call.1} parent=5 // pred_check_branch
        %212 = sbr.rel (%p209) target = $region12
      $region11: #{tpu_custom_call.1} parent=5 // pred_region
        %s213 = ssub.s32 %s21, 1
        // Predicated region
        $region13: #{tpu_custom_call.1} parent=11 // pred_check
          %p214 = pneg %p68
        $region14: #{tpu_custom_call.1} parent=11 // pred_check_branch
          %216 = sbr.rel (%p214) target = $region16
        $region15: #{tpu_custom_call.1} parent=11 // pred_region
          %s218 = ssub.s32 2048, 2048
          %219 = vsyncadd [#allocation6], %s218
          %s220 = sshll.u32 [#allocation5], 4
          %s221 = int_to_ptr.vmem [resolvable:$true] %s220
          %226 = dma.hbm_to_vmem [thread:$0]  %s1, 2048, %s221, [#allocation6], 128, 128, 8
        $region16: #{tpu_custom_call.1} parent=11 // pred_fallthru
          _
        // Predicated region
        $region17: #{tpu_custom_call.1} parent=11 // pred_check
          %p227 = pneg %p89
        $region18: #{tpu_custom_call.1} parent=11 // pred_check_branch
          %229 = sbr.rel (%p227) target = $region20
        $region19: #{tpu_custom_call.1} parent=11 // pred_region
          _
        $region20: #{tpu_custom_call.1} parent=11 // pred_fallthru
          _
        // Predicated region
        $region21: #{tpu_custom_call.1} parent=11 // pred_check
          %p230 = pneg %p110
        $region22: #{tpu_custom_call.1} parent=11 // pred_check_branch
          %232 = sbr.rel (%p230) target = $region24
        $region23: #{tpu_custom_call.1} parent=11 // pred_region
          %s234 = ssub.s32 4096, 4096
          %235 = vsyncadd [#allocation6], %s234
          %s236 = sshll.u32 [#allocation7], 4
          %s237 = int_to_ptr.vmem [resolvable:$true] %s236
          %242 = dma.hbm_to_vmem [thread:$0]  %s3, 4096, %s237, [#allocation6], 128, 128, 8
        $region24: #{tpu_custom_call.1} parent=11 // pred_fallthru
          _
        // Predicated region
        $region25: #{tpu_custom_call.1} parent=11 // pred_check
          %p243 = pneg %p131
        $region26: #{tpu_custom_call.1} parent=11 // pred_check_branch
          %245 = sbr.rel (%p243) target = $region28
        $region27: #{tpu_custom_call.1} parent=11 // pred_region
          _
        $region28: #{tpu_custom_call.1} parent=11 // pred_fallthru
          _
        // Predicated region
        $region29: #{tpu_custom_call.1} parent=11 // pred_check
          %p246 = pneg %p152
        $region30: #{tpu_custom_call.1} parent=11 // pred_check_branch
          %248 = sbr.rel (%p246) target = $region32
        $region31: #{tpu_custom_call.1} parent=11 // pred_region
          %s250 = ssub.s32 2048, 2048
          %251 = vsyncadd [#allocation9], %s250
          %s252 = sshll.u32 [#allocation8], 4
          %s253 = int_to_ptr.vmem [resolvable:$true] %s252
          %258 = dma.hbm_to_vmem [thread:$0]  %s5, 2048, %s253, [#allocation9], 64, 64, 4
        $region32: #{tpu_custom_call.1} parent=11 // pred_fallthru
          _
        // Predicated region
        $region33: #{tpu_custom_call.1} parent=11 // pred_check
          %p259 = pneg %p173
        $region34: #{tpu_custom_call.1} parent=11 // pred_check_branch
          %261 = sbr.rel (%p259) target = $region36
        $region35: #{tpu_custom_call.1} parent=11 // pred_region
          _
        $region36: #{tpu_custom_call.1} parent=11 // pred_fallthru
          _
      $region12: #{tpu_custom_call.1} parent=5 // pred_fallthru
        _
      %p262 = scmp.lt.s32.totalorder %s21, 2
      // Predicated region
      $region37: #{tpu_custom_call.1} parent=5 // pred_check
        %p263 = pneg %p262
      $region38: #{tpu_custom_call.1} parent=5 // pred_check_branch
        %265 = sbr.rel (%p263) target = $region40
      $region39: #{tpu_custom_call.1} parent=5 // pred_region
        // Predicated region
        $region41: #{tpu_custom_call.1} parent=39 // pred_check
          %p266 = pneg %p41
        $region42: #{tpu_custom_call.1} parent=39 // pred_check_branch
          %268 = sbr.rel (%p266) target = $region44
        $region43: #{tpu_custom_call.1} parent=39 // pred_region
          %s269 = sand.u32 %s31, 1
          %s270 = scalar_lea.sflag [#allocation3], %s269
          %s271 = sand.u32 %s31, 1
          %s272 = smul.addr %s271, 128
          %s273 = scalar_lea.vmem [#allocation2], %s272
          %s274 = smul.u32 16, %s21
          %s276 = ssub.s32 2048, 2048
          %277 = vsyncadd %s270, %s276
          %s278 = smul.addr %s274, 128
          %s279 = scalar_lea.hbm %s0, %s278
          %s280 = sshll.u32 %s273, 4
          %s281 = int_to_ptr.vmem [resolvable:$true] %s280
          %286 = dma.hbm_to_vmem [thread:$0]  %s279, 2048, %s281, %s270, 128, 128, 8
        $region44: #{tpu_custom_call.1} parent=39 // pred_fallthru
          _
      $region40: #{tpu_custom_call.1} parent=5 // pred_fallthru
        _
      %p287 = scmp.le.s32.totalorder 1, %s21
      %p288 = scmp.lt.s32.totalorder %s21, 3
      %p289 = pnand %p287, %p288
      %p290 = pneg %p289
      // Predicated region
      $region45: #{tpu_custom_call.1} parent=5 // pred_check
        _
      $region46: #{tpu_custom_call.1} parent=5 // pred_check_branch
        %292 = sbr.rel (%p289) target = $region48
      $region47: #{tpu_custom_call.1} parent=5 // pred_region
        %s293 = ssub.s32 %s21, 1
        %s294 = sand.u32 %s34, 1
        %s295 = scalar_lea.sflag [#allocation3], %s294
        %s296 = sand.u32 %s34, 1
        %s297 = smul.addr %s296, 128
        %s298 = scalar_lea.vmem [#allocation2], %s297
        // Predicated region
        $region49: #{tpu_custom_call.1} parent=47 // pred_check
          %p299 = pneg %p47
        $region50: #{tpu_custom_call.1} parent=47 // pred_check_branch
          %301 = sbr.rel (%p299) target = $region52
        $region51: #{tpu_custom_call.1} parent=47 // pred_region
          %302 = dma.done %s295, 2048
        $region52: #{tpu_custom_call.1} parent=47 // pred_fallthru
          _
        // Predicated region
        $region53: #{tpu_custom_call.1} parent=47 // pred_check
          %p303 = pneg %p68
        $region54: #{tpu_custom_call.1} parent=47 // pred_check_branch
          %305 = sbr.rel (%p303) target = $region56
        $region55: #{tpu_custom_call.1} parent=47 // pred_region
          %306 = dma.done [#allocation6], 2048
        $region56: #{tpu_custom_call.1} parent=47 // pred_fallthru
          _
        // Predicated region
        $region57: #{tpu_custom_call.1} parent=47 // pred_check
          %p307 = pneg %p110
        $region58: #{tpu_custom_call.1} parent=47 // pred_check_branch
          %309 = sbr.rel (%p307) target = $region60
        $region59: #{tpu_custom_call.1} parent=47 // pred_region
          %310 = dma.done [#allocation6], 4096
        $region60: #{tpu_custom_call.1} parent=47 // pred_fallthru
          _
        // Predicated region
        $region61: #{tpu_custom_call.1} parent=47 // pred_check
          %p311 = pneg %p152
        $region62: #{tpu_custom_call.1} parent=47 // pred_check_branch
          %313 = sbr.rel (%p311) target = $region64
        $region63: #{tpu_custom_call.1} parent=47 // pred_region
          %314 = dma.done [#allocation9], 2048
        $region64: #{tpu_custom_call.1} parent=47 // pred_fallthru
          _
        %s315 = sand.u32 %s34, 1
        %s316 = scalar_lea.sflag [#allocation3], %s315
        %s317 = sand.u32 %s34, 1
        %s318 = smul.addr %s317, 128
        %s319 = scalar_lea.vmem [#allocation2], %s318
        %p320 = pneg %p47
        %p321 = pneg %p44
        %p322 = pneg %p68
        %p323 = pneg %p65
        %p324 = pneg %p89
        %p325 = pneg %p86
        %p326 = pneg %p110
        %p327 = pneg %p107
        %p328 = pneg %p131
        %p329 = pneg %p128
        %p330 = pneg %p152
        %p331 = pneg %p149
        %p332 = pneg %p173
        %p333 = pneg %p170
        %p334 = pneg %p199
        %p335 = pneg %p196
        %s336 = sand.u32 %s186, 1
        %s337 = scalar_lea.sflag [#allocation4], %s336
        %s338 = sand.u32 %s186, 1
        %s339 = smul.addr %s338, 128
        %s340 = scalar_lea.vmem [#allocation10], %s339
        %s341 = smul.u32 16, %s26
        %s342 = smul.u32 16, %s26
        %v344 = vld [vmem:[%s298] sm:$0xff]
        %v345 = vld [vmem:[%s298 + $0x8] sm:$0xff]
        %v346 = vld [vmem:[%s298 + $0x10] sm:$0xff]
        %v347 = vld [vmem:[%s298 + $0x18] sm:$0xff]
        %v348 = vld [vmem:[%s298 + $0x20] sm:$0xff]
        %v349 = vld [vmem:[%s298 + $0x28] sm:$0xff]
        %v350 = vld [vmem:[%s298 + $0x30] sm:$0xff]
        %v351 = vld [vmem:[%s298 + $0x38] sm:$0xff]
        %v352 = vld [vmem:[%s298 + $0x40] sm:$0xff]
        %v353 = vld [vmem:[%s298 + $0x48] sm:$0xff]
        %v354 = vld [vmem:[%s298 + $0x50] sm:$0xff]
        %v355 = vld [vmem:[%s298 + $0x58] sm:$0xff]
        %v356 = vld [vmem:[%s298 + $0x60] sm:$0xff]
        %v357 = vld [vmem:[%s298 + $0x68] sm:$0xff]
        %v358 = vld [vmem:[%s298 + $0x70] sm:$0xff]
        %v359 = vld [vmem:[%s298 + $0x78] sm:$0xff]
        %v360 = vpack.c.bf16 %v345, %v344
        %v361 = vpack.c.bf16 %v347, %v346
        %v362 = vpack.c.bf16 %v349, %v348
        %v363 = vpack.c.bf16 %v351, %v350
        %v364 = vpack.c.bf16 %v353, %v352
        %v365 = vpack.c.bf16 %v355, %v354
        %v366 = vpack.c.bf16 %v357, %v356
        %v367 = vpack.c.bf16 %v359, %v358
        %v368 = vld [vmem:[#allocation5] sm:$0xff]
        %v369 = vld [vmem:[#allocation5 + $0x8] sm:$0xff]
        %v370 = vld [vmem:[#allocation5 + $0x10] sm:$0xff]
        %v371 = vld [vmem:[#allocation5 + $0x18] sm:$0xff]
        %v372 = vld [vmem:[#allocation5 + $0x20] sm:$0xff]
        %v373 = vld [vmem:[#allocation5 + $0x28] sm:$0xff]
        %v374 = vld [vmem:[#allocation5 + $0x30] sm:$0xff]
        %v375 = vld [vmem:[#allocation5 + $0x38] sm:$0xff]
        %v376 = vld [vmem:[#allocation5 + $0x40] sm:$0xff]
        %v377 = vld [vmem:[#allocation5 + $0x48] sm:$0xff]
        %v378 = vld [vmem:[#allocation5 + $0x50] sm:$0xff]
        %v379 = vld [vmem:[#allocation5 + $0x58] sm:$0xff]
        %v380 = vld [vmem:[#allocation5 + $0x60] sm:$0xff]
        %v381 = vld [vmem:[#allocation5 + $0x68] sm:$0xff]
        %v382 = vld [vmem:[#allocation5 + $0x70] sm:$0xff]
        %v383 = vld [vmem:[#allocation5 + $0x78] sm:$0xff]
        %v384 = vld [vmem:[%s2] sm:$0x3]
        %v385 = vunpack.c.l.bf16 %v384
        %v387 = vlaneseq
        %v388 = vshrl.u32 %v387, 7
        %v389 = vsub.s32 0, %v388
        %v390 = vrot.slane %v385, %v389
        %v391 = vlaneseq
        %v392 = vshrl.u32 %v391, 7
        %v393 = vsub.s32 2, %v392
        %v394 = vrot.slane %v385, %v393
        %v397 = vlaneseq
        %v398 = vshrl.u32 %v397, 7
        %v399 = vsub.s32 0, %v398
        %v400 = vrot.slane %v390, %v399
        %v401 = vlaneseq
        %v402 = vshrl.u32 %v401, 7
        %v403 = vsub.s32 0, %v402
        %v404 = vrot.slane %v394, %v403
        %v421 = vunpack.c.l.b16 %v368
        %v422 = vunpack.c.h.b16 %v368
        %v423 = vunpack.c.l.b16 %v369
        %v424 = vunpack.c.h.b16 %v369
        %v425 = vunpack.c.l.b16 %v370
        %v426 = vunpack.c.h.b16 %v370
        %v427 = vunpack.c.l.b16 %v371
        %v428 = vunpack.c.h.b16 %v371
        %v429 = vunpack.c.l.b16 %v372
        %v430 = vunpack.c.h.b16 %v372
        %v431 = vunpack.c.l.b16 %v373
        %v432 = vunpack.c.h.b16 %v373
        %v433 = vunpack.c.l.b16 %v374
        %v434 = vunpack.c.h.b16 %v374
        %v435 = vunpack.c.l.b16 %v375
        %v436 = vunpack.c.h.b16 %v375
        %v437 = vunpack.c.l.b16 %v376
        %v438 = vunpack.c.h.b16 %v376
        %v439 = vunpack.c.l.b16 %v377
        %v440 = vunpack.c.h.b16 %v377
        %v441 = vunpack.c.l.b16 %v378
        %v442 = vunpack.c.h.b16 %v378
        %v443 = vunpack.c.l.b16 %v379
        %v444 = vunpack.c.h.b16 %v379
        %v445 = vunpack.c.l.b16 %v380
        %v446 = vunpack.c.h.b16 %v380
        %v447 = vunpack.c.l.b16 %v381
        %v448 = vunpack.c.h.b16 %v381
        %v449 = vunpack.c.l.b16 %v382
        %v450 = vunpack.c.h.b16 %v382
        %v451 = vunpack.c.l.b16 %v383
        %v452 = vunpack.c.h.b16 %v383
        %v453 = vpack.c.b16 %v423, %v421
        %v454 = vpack.c.b16 %v424, %v422
        %v455 = vpack.c.b16 %v427, %v425
        %v456 = vpack.c.b16 %v428, %v426
        %v457 = vpack.c.b16 %v431, %v429
        %v458 = vpack.c.b16 %v432, %v430
        %v459 = vpack.c.b16 %v435, %v433
        %v460 = vpack.c.b16 %v436, %v434
        %v461 = vpack.c.b16 %v439, %v437
        %v462 = vpack.c.b16 %v440, %v438
        %v463 = vpack.c.b16 %v443, %v441
        %v464 = vpack.c.b16 %v444, %v442
        %v465 = vpack.c.b16 %v447, %v445
        %v466 = vpack.c.b16 %v448, %v446
        %v467 = vpack.c.b16 %v451, %v449
        %v468 = vpack.c.b16 %v452, %v450
        %485 = vmatprep.subr.bf16.mxu0 %v454
        %486 = vmatpush1.bf16.msra.mxu0 %v453
        %487 = vmatprep.subr.bf16.mxu0 %v456
        %488 = vmatpush1.bf16.msra.mxu0 %v455
        %489 = vmatprep.subr.bf16.mxu0 %v458
        %490 = vmatpush1.bf16.msra.mxu0 %v457
        %491 = vmatprep.subr.bf16.mxu0 %v460
        %492 = vmatpush1.bf16.msra.mxu0 %v459
        %493 = vmatprep.subr.bf16.mxu0 %v462
        %494 = vmatpush1.bf16.msra.mxu0 %v461
        %495 = vmatprep.subr.bf16.mxu0 %v464
        %496 = vmatpush1.bf16.msra.mxu0 %v463
        %497 = vmatprep.subr.bf16.mxu0 %v466
        %498 = vmatpush1.bf16.msra.mxu0 %v465
        %499 = vmatprep.subr.bf16.mxu0 %v468
        %500 = vmatpush1.bf16.msra.mxu0 %v467
        %501 = vmatprep.subr.bf16.mxu0 0
        %502 = vmatpush1.bf16.msra.mxu0 0
        %503 = vmatprep.subr.bf16.mxu0 0
        %504 = vmatpush1.bf16.msra.mxu0 0
        %505 = vmatprep.subr.bf16.mxu0 0
        %506 = vmatpush1.bf16.msra.mxu0 0
        %507 = vmatprep.subr.bf16.mxu0 0
        %508 = vmatpush1.bf16.msra.mxu0 0
        %509 = vmatprep.subr.bf16.mxu0 0
        %510 = vmatpush1.bf16.msra.mxu0 0
        %511 = vmatprep.subr.bf16.mxu0 0
        %512 = vmatpush1.bf16.msra.mxu0 0
        %513 = vmatprep.subr.bf16.mxu0 0
        %514 = vmatpush1.bf16.msra.mxu0 0
        %515 = vmatprep.subr.bf16.mxu0 0
        %516 = vmatpush1.bf16.msra.mxu0 0
        %517 = vmatprep.mubr.bf16.mxu0 0
        %518 = vmatmul.mubr.bf16.gmra.mrb[0].mxu0 %v360
        %v519 = vpop.f32.mrb[0].mxu0
        %v520 = vadd.f32 %v400, %v519
        %v521 = vpop.f32.mrb[0].mxu0
        %v522 = vadd.f32 %v404, %v521
        %v523 = vpop.f32.mrb[0].mxu0
        %v524 = vadd.f32 %v400, %v523
        %v525 = vpop.f32.mrb[0].mxu0
        %v526 = vadd.f32 %v404, %v525
        %527 = vmatprep.mubr.bf16.mxu0 0
        %528 = vmatmul.mubr.bf16.gmra.mrb[0].mxu0 %v361
        %v529 = vpop.f32.mrb[0].mxu0
        %v530 = vadd.f32 %v400, %v529
        %v531 = vpop.f32.mrb[0].mxu0
        %v532 = vadd.f32 %v404, %v531
        %v533 = vpop.f32.mrb[0].mxu0
        %v534 = vadd.f32 %v400, %v533
        %v535 = vpop.f32.mrb[0].mxu0
        %v536 = vadd.f32 %v404, %v535
        %537 = vmatprep.mubr.bf16.mxu0 0
        %538 = vmatmul.mubr.bf16.gmra.mrb[0].mxu0 %v362
        %v539 = vpop.f32.mrb[0].mxu0
        %v540 = vadd.f32 %v400, %v539
        %v541 = vpop.f32.mrb[0].mxu0
        %v542 = vadd.f32 %v404, %v541
        %v543 = vpop.f32.mrb[0].mxu0
        %v544 = vadd.f32 %v400, %v543
        %v545 = vpop.f32.mrb[0].mxu0
        %v546 = vadd.f32 %v404, %v545
        %547 = vmatprep.mubr.bf16.mxu0 0
        %548 = vmatmul.mubr.bf16.gmra.mrb[0].mxu0 %v363
        %v549 = vpop.f32.mrb[0].mxu0
        %v550 = vadd.f32 %v400, %v549
        %v551 = vpop.f32.mrb[0].mxu0
        %v552 = vadd.f32 %v404, %v551
        %v553 = vpop.f32.mrb[0].mxu0
        %v554 = vadd.f32 %v400, %v553
        %v555 = vpop.f32.mrb[0].mxu0
        %v556 = vadd.f32 %v404, %v555
        %557 = vmatprep.mubr.bf16.mxu0 0
        %558 = vmatmul.mubr.bf16.gmra.mrb[0].mxu0 %v364
        %v559 = vpop.f32.mrb[0].mxu0
        %v560 = vadd.f32 %v400, %v559
        %v561 = vpop.f32.mrb[0].mxu0
        %v562 = vadd.f32 %v404, %v561
        %v563 = vpop.f32.mrb[0].mxu0
        %v564 = vadd.f32 %v400, %v563
        %v565 = vpop.f32.mrb[0].mxu0
        %v566 = vadd.f32 %v404, %v565
        %567 = vmatprep.mubr.bf16.mxu0 0
        %568 = vmatmul.mubr.bf16.gmra.mrb[0].mxu0 %v365
        %v569 = vpop.f32.mrb[0].mxu0
        %v570 = vadd.f32 %v400, %v569
        %v571 = vpop.f32.mrb[0].mxu0
        %v572 = vadd.f32 %v404, %v571
        %v573 = vpop.f32.mrb[0].mxu0
        %v574 = vadd.f32 %v400, %v573
        %v575 = vpop.f32.mrb[0].mxu0
        %v576 = vadd.f32 %v404, %v575
        %577 = vmatprep.mubr.bf16.mxu0 0
        %578 = vmatmul.mubr.bf16.gmra.mrb[0].mxu0 %v366
        %v579 = vpop.f32.mrb[0].mxu0
        %v580 = vadd.f32 %v400, %v579
        %v581 = vpop.f32.mrb[0].mxu0
        %v582 = vadd.f32 %v404, %v581
        %v583 = vpop.f32.mrb[0].mxu0
        %v584 = vadd.f32 %v400, %v583
        %v585 = vpop.f32.mrb[0].mxu0
        %v586 = vadd.f32 %v404, %v585
        %587 = vmatprep.mubr.bf16.mxu0 0
        %588 = vmatmul.mubr.bf16.gmra.mrb[0].mxu0 %v367
        %v589 = vpop.f32.mrb[0].mxu0
        %v590 = vadd.f32 %v400, %v589
        %v591 = vpop.f32.mrb[0].mxu0
        %v592 = vadd.f32 %v404, %v591
        %v593 = vpop.f32.mrb[0].mxu0
        %v594 = vadd.f32 %v400, %v593
        %v595 = vpop.f32.mrb[0].mxu0
        %v596 = vadd.f32 %v404, %v595
        %597 = vdwg.mxu0
        %v598 = vmax.f32 %v520, 0.0
        %v599 = vmax.f32 %v522, 0.0
        %v600 = vmax.f32 %v524, 0.0
        %v601 = vmax.f32 %v526, 0.0
        %v602 = vmax.f32 %v530, 0.0
        %v603 = vmax.f32 %v532, 0.0
        %v604 = vmax.f32 %v534, 0.0
        %v605 = vmax.f32 %v536, 0.0
        %v606 = vmax.f32 %v540, 0.0
        %v607 = vmax.f32 %v542, 0.0
        %v608 = vmax.f32 %v544, 0.0
        %v609 = vmax.f32 %v546, 0.0
        %v610 = vmax.f32 %v550, 0.0
        %v611 = vmax.f32 %v552, 0.0
        %v612 = vmax.f32 %v554, 0.0
        %v613 = vmax.f32 %v556, 0.0
        %v614 = vmax.f32 %v560, 0.0
        %v615 = vmax.f32 %v562, 0.0
        %v616 = vmax.f32 %v564, 0.0
        %v617 = vmax.f32 %v566, 0.0
        %v618 = vmax.f32 %v570, 0.0
        %v619 = vmax.f32 %v572, 0.0
        %v620 = vmax.f32 %v574, 0.0
        %v621 = vmax.f32 %v576, 0.0
        %v622 = vmax.f32 %v580, 0.0
        %v623 = vmax.f32 %v582, 0.0
        %v624 = vmax.f32 %v584, 0.0
        %v625 = vmax.f32 %v586, 0.0
        %v626 = vmax.f32 %v590, 0.0
        %v627 = vmax.f32 %v592, 0.0
        %v628 = vmax.f32 %v594, 0.0
        %v629 = vmax.f32 %v596, 0.0
        %v630 = vpack.c.bf16 %v600, %v598
        %v631 = vpack.c.bf16 %v601, %v599
        %v632 = vpack.c.bf16 %v604, %v602
        %v633 = vpack.c.bf16 %v605, %v603
        %v634 = vpack.c.bf16 %v608, %v606
        %v635 = vpack.c.bf16 %v609, %v607
        %v636 = vpack.c.bf16 %v612, %v610
        %v637 = vpack.c.bf16 %v613, %v611
        %v638 = vpack.c.bf16 %v616, %v614
        %v639 = vpack.c.bf16 %v617, %v615
        %v640 = vpack.c.bf16 %v620, %v618
        %v641 = vpack.c.bf16 %v621, %v619
        %v642 = vpack.c.bf16 %v624, %v622
        %v643 = vpack.c.bf16 %v625, %v623
        %v644 = vpack.c.bf16 %v628, %v626
        %v645 = vpack.c.bf16 %v629, %v627
        %v646 = vld [vmem:[#allocation7] sm:$0xff]
        %v647 = vld [vmem:[#allocation7 + $0x8] sm:$0xff]
        %v648 = vld [vmem:[#allocation7 + $0x10] sm:$0xff]
        %v649 = vld [vmem:[#allocation7 + $0x18] sm:$0xff]
        %v650 = vld [vmem:[#allocation7 + $0x20] sm:$0xff]
        %v651 = vld [vmem:[#allocation7 + $0x28] sm:$0xff]
        %v652 = vld [vmem:[#allocation7 + $0x30] sm:$0xff]
        %v653 = vld [vmem:[#allocation7 + $0x38] sm:$0xff]
        %v654 = vld [vmem:[#allocation7 + $0x40] sm:$0xff]
        %v655 = vld [vmem:[#allocation7 + $0x48] sm:$0xff]
        %v656 = vld [vmem:[#allocation7 + $0x50] sm:$0xff]
        %v657 = vld [vmem:[#allocation7 + $0x58] sm:$0xff]
        %v658 = vld [vmem:[#allocation7 + $0x60] sm:$0xff]
        %v659 = vld [vmem:[#allocation7 + $0x68] sm:$0xff]
        %v660 = vld [vmem:[#allocation7 + $0x70] sm:$0xff]
        %v661 = vld [vmem:[#allocation7 + $0x78] sm:$0xff]
        %v662 = vld [vmem:[#allocation7 + $0x80] sm:$0xff]
        %v663 = vld [vmem:[#allocation7 + $0x88] sm:$0xff]
        %v664 = vld [vmem:[#allocation7 + $0x90] sm:$0xff]
        %v665 = vld [vmem:[#allocation7 + $0x98] sm:$0xff]
        %v666 = vld [vmem:[#allocation7 + $0xa0] sm:$0xff]
        %v667 = vld [vmem:[#allocation7 + $0xa8] sm:$0xff]
        %v668 = vld [vmem:[#allocation7 + $0xb0] sm:$0xff]
        %v669 = vld [vmem:[#allocation7 + $0xb8] sm:$0xff]
        %v670 = vld [vmem:[#allocation7 + $0xc0] sm:$0xff]
        %v671 = vld [vmem:[#allocation7 + $0xc8] sm:$0xff]
        %v672 = vld [vmem:[#allocation7 + $0xd0] sm:$0xff]
        %v673 = vld [vmem:[#allocation7 + $0xd8] sm:$0xff]
        %v674 = vld [vmem:[#allocation7 + $0xe0] sm:$0xff]
        %v675 = vld [vmem:[#allocation7 + $0xe8] sm:$0xff]
        %v676 = vld [vmem:[#allocation7 + $0xf0] sm:$0xff]
        %v677 = vld [vmem:[#allocation7 + $0xf8] sm:$0xff]
        %v678 = vld [vmem:[%s4] sm:$0x3]
        %v679 = vunpack.c.l.bf16 %v678
        %v681 = vlaneseq
        %v682 = vshrl.u32 %v681, 7
        %v683 = vsub.s32 0, %v682
        %v684 = vrot.slane %v679, %v683
        %v685 = vlaneseq
        %v686 = vshrl.u32 %v685, 7
        %v687 = vsub.s32 2, %v686
        %v688 = vrot.slane %v679, %v687
        %v691 = vlaneseq
        %v692 = vshrl.u32 %v691, 7
        %v693 = vsub.s32 0, %v692
        %v694 = vrot.slane %v684, %v693
        %v695 = vlaneseq
        %v696 = vshrl.u32 %v695, 7
        %v697 = vsub.s32 0, %v696
        %v698 = vrot.slane %v688, %v697
        %v731 = vunpack.c.l.b16 %v646
        %v732 = vunpack.c.h.b16 %v646
        %v733 = vunpack.c.l.b16 %v647
        %v734 = vunpack.c.h.b16 %v647
        %v735 = vunpack.c.l.b16 %v648
        %v736 = vunpack.c.h.b16 %v648
        %v737 = vunpack.c.l.b16 %v649
        %v738 = vunpack.c.h.b16 %v649
        %v739 = vunpack.c.l.b16 %v650
        %v740 = vunpack.c.h.b16 %v650
        %v741 = vunpack.c.l.b16 %v651
        %v742 = vunpack.c.h.b16 %v651
        %v743 = vunpack.c.l.b16 %v652
        %v744 = vunpack.c.h.b16 %v652
        %v745 = vunpack.c.l.b16 %v653
        %v746 = vunpack.c.h.b16 %v653
        %v747 = vunpack.c.l.b16 %v654
        %v748 = vunpack.c.h.b16 %v654
        %v749 = vunpack.c.l.b16 %v655
        %v750 = vunpack.c.h.b16 %v655
        %v751 = vunpack.c.l.b16 %v656
        %v752 = vunpack.c.h.b16 %v656
        %v753 = vunpack.c.l.b16 %v657
        %v754 = vunpack.c.h.b16 %v657
        %v755 = vunpack.c.l.b16 %v658
        %v756 = vunpack.c.h.b16 %v658
        %v757 = vunpack.c.l.b16 %v659
        %v758 = vunpack.c.h.b16 %v659
        %v759 = vunpack.c.l.b16 %v660
        %v760 = vunpack.c.h.b16 %v660
        %v761 = vunpack.c.l.b16 %v661
        %v762 = vunpack.c.h.b16 %v661
        %v763 = vunpack.c.l.b16 %v662
        %v764 = vunpack.c.h.b16 %v662
        %v765 = vunpack.c.l.b16 %v663
        %v766 = vunpack.c.h.b16 %v663
        %v767 = vunpack.c.l.b16 %v664
        %v768 = vunpack.c.h.b16 %v664
        %v769 = vunpack.c.l.b16 %v665
        %v770 = vunpack.c.h.b16 %v665
        %v771 = vunpack.c.l.b16 %v666
        %v772 = vunpack.c.h.b16 %v666
        %v773 = vunpack.c.l.b16 %v667
        %v774 = vunpack.c.h.b16 %v667
        %v775 = vunpack.c.l.b16 %v668
        %v776 = vunpack.c.h.b16 %v668
        %v777 = vunpack.c.l.b16 %v669
        %v778 = vunpack.c.h.b16 %v669
        %v779 = vunpack.c.l.b16 %v670
        %v780 = vunpack.c.h.b16 %v670
        %v781 = vunpack.c.l.b16 %v671
        %v782 = vunpack.c.h.b16 %v671
        %v783 = vunpack.c.l.b16 %v672
        %v784 = vunpack.c.h.b16 %v672
        %v785 = vunpack.c.l.b16 %v673
        %v786 = vunpack.c.h.b16 %v673
        %v787 = vunpack.c.l.b16 %v674
        %v788 = vunpack.c.h.b16 %v674
        %v789 = vunpack.c.l.b16 %v675
        %v790 = vunpack.c.h.b16 %v675
        %v791 = vunpack.c.l.b16 %v676
        %v792 = vunpack.c.h.b16 %v676
        %v793 = vunpack.c.l.b16 %v677
        %v794 = vunpack.c.h.b16 %v677
        %v795 = vpack.c.b16 %v733, %v731
        %v796 = vpack.c.b16 %v734, %v732
        %v797 = vpack.c.b16 %v737, %v735
        %v798 = vpack.c.b16 %v738, %v736
        %v799 = vpack.c.b16 %v741, %v739
        %v800 = vpack.c.b16 %v742, %v740
        %v801 = vpack.c.b16 %v745, %v743
        %v802 = vpack.c.b16 %v746, %v744
        %v803 = vpack.c.b16 %v749, %v747
        %v804 = vpack.c.b16 %v750, %v748
        %v805 = vpack.c.b16 %v753, %v751
        %v806 = vpack.c.b16 %v754, %v752
        %v807 = vpack.c.b16 %v757, %v755
        %v808 = vpack.c.b16 %v758, %v756
        %v809 = vpack.c.b16 %v761, %v759
        %v810 = vpack.c.b16 %v762, %v760
        %v811 = vpack.c.b16 %v765, %v763
        %v812 = vpack.c.b16 %v766, %v764
        %v813 = vpack.c.b16 %v769, %v767
        %v814 = vpack.c.b16 %v770, %v768
        %v815 = vpack.c.b16 %v773, %v771
        %v816 = vpack.c.b16 %v774, %v772
        %v817 = vpack.c.b16 %v777, %v775
        %v818 = vpack.c.b16 %v778, %v776
        %v819 = vpack.c.b16 %v781, %v779
        %v820 = vpack.c.b16 %v782, %v780
        %v821 = vpack.c.b16 %v785, %v783
        %v822 = vpack.c.b16 %v786, %v784
        %v823 = vpack.c.b16 %v789, %v787
        %v824 = vpack.c.b16 %v790, %v788
        %v825 = vpack.c.b16 %v793, %v791
        %v826 = vpack.c.b16 %v794, %v792
        %859 = vmatprep.subr.bf16.mxu0 %v796
        %860 = vmatpush1.bf16.msra.mxu0 %v795
        %861 = vmatprep.subr.bf16.mxu0 %v798
        %862 = vmatpush1.bf16.msra.mxu0 %v797
        %863 = vmatprep.subr.bf16.mxu0 %v800
        %864 = vmatpush1.bf16.msra.mxu0 %v799
        %865 = vmatprep.subr.bf16.mxu0 %v802
        %866 = vmatpush1.bf16.msra.mxu0 %v801
        %867 = vmatprep.subr.bf16.mxu0 %v804
        %868 = vmatpush1.bf16.msra.mxu0 %v803
        %869 = vmatprep.subr.bf16.mxu0 %v806
        %870 = vmatpush1.bf16.msra.mxu0 %v805
        %871 = vmatprep.subr.bf16.mxu0 %v808
        %872 = vmatpush1.bf16.msra.mxu0 %v807
        %873 = vmatprep.subr.bf16.mxu0 %v810
        %874 = vmatpush1.bf16.msra.mxu0 %v809
        %875 = vmatprep.subr.bf16.mxu0 %v812
        %876 = vmatpush1.bf16.msra.mxu0 %v811
        %877 = vmatprep.subr.bf16.mxu0 %v814
        %878 = vmatpush1.bf16.msra.mxu0 %v813
        %879 = vmatprep.subr.bf16.mxu0 %v816
        %880 = vmatpush1.bf16.msra.mxu0 %v815
        %881 = vmatprep.subr.bf16.mxu0 %v818
        %882 = vmatpush1.bf16.msra.mxu0 %v817
        %883 = vmatprep.subr.bf16.mxu0 %v820
        %884 = vmatpush1.bf16.msra.mxu0 %v819
        %885 = vmatprep.subr.bf16.mxu0 %v822
        %886 = vmatpush1.bf16.msra.mxu0 %v821
        %887 = vmatprep.subr.bf16.mxu0 %v824
        %888 = vmatpush1.bf16.msra.mxu0 %v823
        %889 = vmatprep.subr.bf16.mxu0 %v826
        %890 = vmatpush1.bf16.msra.mxu0 %v825
        %891 = vmatprep.mubr.bf16.mxu0 %v631
        %892 = vmatmul.mubr.bf16.gmra.mrb[0].mxu0 %v630
        %v893 = vpop.f32.mrb[0].mxu0
        %v894 = vadd.f32 %v694, %v893
        %v895 = vpop.f32.mrb[0].mxu0
        %v896 = vadd.f32 %v698, %v895
        %v897 = vpop.f32.mrb[0].mxu0
        %v898 = vadd.f32 %v694, %v897
        %v899 = vpop.f32.mrb[0].mxu0
        %v900 = vadd.f32 %v698, %v899
        %901 = vmatprep.mubr.bf16.mxu0 %v633
        %902 = vmatmul.mubr.bf16.gmra.mrb[0].mxu0 %v632
        %v903 = vpop.f32.mrb[0].mxu0
        %v904 = vadd.f32 %v694, %v903
        %v905 = vpop.f32.mrb[0].mxu0
        %v906 = vadd.f32 %v698, %v905
        %v907 = vpop.f32.mrb[0].mxu0
        %v908 = vadd.f32 %v694, %v907
        %v909 = vpop.f32.mrb[0].mxu0
        %v910 = vadd.f32 %v698, %v909
        %911 = vmatprep.mubr.bf16.mxu0 %v635
        %912 = vmatmul.mubr.bf16.gmra.mrb[0].mxu0 %v634
        %v913 = vpop.f32.mrb[0].mxu0
        %v914 = vadd.f32 %v694, %v913
        %v915 = vpop.f32.mrb[0].mxu0
        %v916 = vadd.f32 %v698, %v915
        %v917 = vpop.f32.mrb[0].mxu0
        %v918 = vadd.f32 %v694, %v917
        %v919 = vpop.f32.mrb[0].mxu0
        %v920 = vadd.f32 %v698, %v919
        %921 = vmatprep.mubr.bf16.mxu0 %v637
        %922 = vmatmul.mubr.bf16.gmra.mrb[0].mxu0 %v636
        %v923 = vpop.f32.mrb[0].mxu0
        %v924 = vadd.f32 %v694, %v923
        %v925 = vpop.f32.mrb[0].mxu0
        %v926 = vadd.f32 %v698, %v925
        %v927 = vpop.f32.mrb[0].mxu0
        %v928 = vadd.f32 %v694, %v927
        %v929 = vpop.f32.mrb[0].mxu0
        %v930 = vadd.f32 %v698, %v929
        %931 = vmatprep.mubr.bf16.mxu0 %v639
        %932 = vmatmul.mubr.bf16.gmra.mrb[0].mxu0 %v638
        %v933 = vpop.f32.mrb[0].mxu0
        %v934 = vadd.f32 %v694, %v933
        %v935 = vpop.f32.mrb[0].mxu0
        %v936 = vadd.f32 %v698, %v935
        %v937 = vpop.f32.mrb[0].mxu0
        %v938 = vadd.f32 %v694, %v937
        %v939 = vpop.f32.mrb[0].mxu0
        %v940 = vadd.f32 %v698, %v939
        %941 = vmatprep.mubr.bf16.mxu0 %v641
        %942 = vmatmul.mubr.bf16.gmra.mrb[0].mxu0 %v640
        %v943 = vpop.f32.mrb[0].mxu0
        %v944 = vadd.f32 %v694, %v943
        %v945 = vpop.f32.mrb[0].mxu0
        %v946 = vadd.f32 %v698, %v945
        %v947 = vpop.f32.mrb[0].mxu0
        %v948 = vadd.f32 %v694, %v947
        %v949 = vpop.f32.mrb[0].mxu0
        %v950 = vadd.f32 %v698, %v949
        %951 = vmatprep.mubr.bf16.mxu0 %v643
        %952 = vmatmul.mubr.bf16.gmra.mrb[0].mxu0 %v642
        %v953 = vpop.f32.mrb[0].mxu0
        %v954 = vadd.f32 %v694, %v953
        %v955 = vpop.f32.mrb[0].mxu0
        %v956 = vadd.f32 %v698, %v955
        %v957 = vpop.f32.mrb[0].mxu0
        %v958 = vadd.f32 %v694, %v957
        %v959 = vpop.f32.mrb[0].mxu0
        %v960 = vadd.f32 %v698, %v959
        %961 = vmatprep.mubr.bf16.mxu0 %v645
        %962 = vmatmul.mubr.bf16.gmra.mrb[0].mxu0 %v644
        %v963 = vpop.f32.mrb[0].mxu0
        %v964 = vadd.f32 %v694, %v963
        %v965 = vpop.f32.mrb[0].mxu0
        %v966 = vadd.f32 %v698, %v965
        %v967 = vpop.f32.mrb[0].mxu0
        %v968 = vadd.f32 %v694, %v967
        %v969 = vpop.f32.mrb[0].mxu0
        %v970 = vadd.f32 %v698, %v969
        %971 = vdwg.mxu0
        %v972 = vmax.f32 %v894, 0.0
        %v973 = vmax.f32 %v896, 0.0
        %v974 = vmax.f32 %v898, 0.0
        %v975 = vmax.f32 %v900, 0.0
        %v976 = vmax.f32 %v904, 0.0
        %v977 = vmax.f32 %v906, 0.0
        %v978 = vmax.f32 %v908, 0.0
        %v979 = vmax.f32 %v910, 0.0
        %v980 = vmax.f32 %v914, 0.0
        %v981 = vmax.f32 %v916, 0.0
        %v982 = vmax.f32 %v918, 0.0
        %v983 = vmax.f32 %v920, 0.0
        %v984 = vmax.f32 %v924, 0.0
        %v985 = vmax.f32 %v926, 0.0
        %v986 = vmax.f32 %v928, 0.0
        %v987 = vmax.f32 %v930, 0.0
        %v988 = vmax.f32 %v934, 0.0
        %v989 = vmax.f32 %v936, 0.0
        %v990 = vmax.f32 %v938, 0.0
        %v991 = vmax.f32 %v940, 0.0
        %v992 = vmax.f32 %v944, 0.0
        %v993 = vmax.f32 %v946, 0.0
        %v994 = vmax.f32 %v948, 0.0
        %v995 = vmax.f32 %v950, 0.0
        %v996 = vmax.f32 %v954, 0.0
        %v997 = vmax.f32 %v956, 0.0
        %v998 = vmax.f32 %v958, 0.0
        %v999 = vmax.f32 %v960, 0.0
        %v1000 = vmax.f32 %v964, 0.0
        %v1001 = vmax.f32 %v966, 0.0
        %v1002 = vmax.f32 %v968, 0.0
        %v1003 = vmax.f32 %v970, 0.0
        %v1004 = vpack.c.bf16 %v974, %v972
        %v1005 = vpack.c.bf16 %v975, %v973
        %v1006 = vpack.c.bf16 %v978, %v976
        %v1007 = vpack.c.bf16 %v979, %v977
        %v1008 = vpack.c.bf16 %v982, %v980
        %v1009 = vpack.c.bf16 %v983, %v981
        %v1010 = vpack.c.bf16 %v986, %v984
        %v1011 = vpack.c.bf16 %v987, %v985
        %v1012 = vpack.c.bf16 %v990, %v988
        %v1013 = vpack.c.bf16 %v991, %v989
        %v1014 = vpack.c.bf16 %v994, %v992
        %v1015 = vpack.c.bf16 %v995, %v993
        %v1016 = vpack.c.bf16 %v998, %v996
        %v1017 = vpack.c.bf16 %v999, %v997
        %v1018 = vpack.c.bf16 %v1002, %v1000
        %v1019 = vpack.c.bf16 %v1003, %v1001
        %v1020 = vld [vmem:[#allocation8] sm:$0xf]
        %v1021 = vld [vmem:[#allocation8 + $0x4] sm:$0xf]
        %v1022 = vld [vmem:[#allocation8 + $0x8] sm:$0xf]
        %v1023 = vld [vmem:[#allocation8 + $0xc] sm:$0xf]
        %v1024 = vld [vmem:[#allocation8 + $0x10] sm:$0xf]
        %v1025 = vld [vmem:[#allocation8 + $0x14] sm:$0xf]
        %v1026 = vld [vmem:[#allocation8 + $0x18] sm:$0xf]
        %v1027 = vld [vmem:[#allocation8 + $0x1c] sm:$0xf]
        %v1028 = vld [vmem:[#allocation8 + $0x20] sm:$0xf]
        %v1029 = vld [vmem:[#allocation8 + $0x24] sm:$0xf]
        %v1030 = vld [vmem:[#allocation8 + $0x28] sm:$0xf]
        %v1031 = vld [vmem:[#allocation8 + $0x2c] sm:$0xf]
        %v1032 = vld [vmem:[#allocation8 + $0x30] sm:$0xf]
        %v1033 = vld [vmem:[#allocation8 + $0x34] sm:$0xf]
        %v1034 = vld [vmem:[#allocation8 + $0x38] sm:$0xf]
        %v1035 = vld [vmem:[#allocation8 + $0x3c] sm:$0xf]
        %v1036 = vld [vmem:[#allocation8 + $0x40] sm:$0xf]
        %v1037 = vld [vmem:[#allocation8 + $0x44] sm:$0xf]
        %v1038 = vld [vmem:[#allocation8 + $0x48] sm:$0xf]
        %v1039 = vld [vmem:[#allocation8 + $0x4c] sm:$0xf]
        %v1040 = vld [vmem:[#allocation8 + $0x50] sm:$0xf]
        %v1041 = vld [vmem:[#allocation8 + $0x54] sm:$0xf]
        %v1042 = vld [vmem:[#allocation8 + $0x58] sm:$0xf]
        %v1043 = vld [vmem:[#allocation8 + $0x5c] sm:$0xf]
        %v1044 = vld [vmem:[#allocation8 + $0x60] sm:$0xf]
        %v1045 = vld [vmem:[#allocation8 + $0x64] sm:$0xf]
        %v1046 = vld [vmem:[#allocation8 + $0x68] sm:$0xf]
        %v1047 = vld [vmem:[#allocation8 + $0x6c] sm:$0xf]
        %v1048 = vld [vmem:[#allocation8 + $0x70] sm:$0xf]
        %v1049 = vld [vmem:[#allocation8 + $0x74] sm:$0xf]
        %v1050 = vld [vmem:[#allocation8 + $0x78] sm:$0xf]
        %v1051 = vld [vmem:[#allocation8 + $0x7c] sm:$0xf]
        %v1052 = vld [vmem:[%s6] sm:$0x1]
        %v1053 = vunpack.c.l.bf16 %v1052
        %v1054 = vlaneseq
        %v1055 = vshrl.u32 %v1054, 7
        %v1056 = vsub.s32 0, %v1055
        %v1057 = vrot.slane %v1053, %v1056
        %v1090 = vunpack.c.l.b16 %v1020
        %v1091 = vunpack.c.l.b16 %v1021
        %v1092 = vunpack.c.l.b16 %v1022
        %v1093 = vunpack.c.l.b16 %v1023
        %v1094 = vunpack.c.l.b16 %v1024
        %v1095 = vunpack.c.l.b16 %v1025
        %v1096 = vunpack.c.l.b16 %v1026
        %v1097 = vunpack.c.l.b16 %v1027
        %v1098 = vunpack.c.l.b16 %v1028
        %v1099 = vunpack.c.l.b16 %v1029
        %v1100 = vunpack.c.l.b16 %v1030
        %v1101 = vunpack.c.l.b16 %v1031
        %v1102 = vunpack.c.l.b16 %v1032
        %v1103 = vunpack.c.l.b16 %v1033
        %v1104 = vunpack.c.l.b16 %v1034
        %v1105 = vunpack.c.l.b16 %v1035
        %v1106 = vunpack.c.l.b16 %v1036
        %v1107 = vunpack.c.l.b16 %v1037
        %v1108 = vunpack.c.l.b16 %v1038
        %v1109 = vunpack.c.l.b16 %v1039
        %v1110 = vunpack.c.l.b16 %v1040
        %v1111 = vunpack.c.l.b16 %v1041
        %v1112 = vunpack.c.l.b16 %v1042
        %v1113 = vunpack.c.l.b16 %v1043
        %v1114 = vunpack.c.l.b16 %v1044
        %v1115 = vunpack.c.l.b16 %v1045
        %v1116 = vunpack.c.l.b16 %v1046
        %v1117 = vunpack.c.l.b16 %v1047
        %v1118 = vunpack.c.l.b16 %v1048
        %v1119 = vunpack.c.l.b16 %v1049
        %v1120 = vunpack.c.l.b16 %v1050
        %v1121 = vunpack.c.l.b16 %v1051
        %v1122 = vpack.c.b16 %v1091, %v1090
        %v1123 = vpack.c.b16 %v1093, %v1092
        %v1124 = vpack.c.b16 %v1095, %v1094
        %v1125 = vpack.c.b16 %v1097, %v1096
        %v1126 = vpack.c.b16 %v1099, %v1098
        %v1127 = vpack.c.b16 %v1101, %v1100
        %v1128 = vpack.c.b16 %v1103, %v1102
        %v1129 = vpack.c.b16 %v1105, %v1104
        %v1130 = vpack.c.b16 %v1107, %v1106
        %v1131 = vpack.c.b16 %v1109, %v1108
        %v1132 = vpack.c.b16 %v1111, %v1110
        %v1133 = vpack.c.b16 %v1113, %v1112
        %v1134 = vpack.c.b16 %v1115, %v1114
        %v1135 = vpack.c.b16 %v1117, %v1116
        %v1136 = vpack.c.b16 %v1119, %v1118
        %v1137 = vpack.c.b16 %v1121, %v1120
        %1154 = vmatprep.subr.bf16.mxu0 0
        %1155 = vmatpush1.bf16.msra.mxu0 %v1122
        %1156 = vmatprep.subr.bf16.mxu0 0
        %1157 = vmatpush1.bf16.msra.mxu0 %v1123
        %1158 = vmatprep.subr.bf16.mxu0 0
        %1159 = vmatpush1.bf16.msra.mxu0 %v1124
        %1160 = vmatprep.subr.bf16.mxu0 0
        %1161 = vmatpush1.bf16.msra.mxu0 %v1125
        %1162 = vmatprep.subr.bf16.mxu0 0
        %1163 = vmatpush1.bf16.msra.mxu0 %v1126
        %1164 = vmatprep.subr.bf16.mxu0 0
        %1165 = vmatpush1.bf16.msra.mxu0 %v1127
        %1166 = vmatprep.subr.bf16.mxu0 0
        %1167 = vmatpush1.bf16.msra.mxu0 %v1128
        %1168 = vmatprep.subr.bf16.mxu0 0
        %1169 = vmatpush1.bf16.msra.mxu0 %v1129
        %1170 = vmatprep.subr.bf16.mxu0 0
        %1171 = vmatpush1.bf16.msra.mxu0 %v1130
        %1172 = vmatprep.subr.bf16.mxu0 0
        %1173 = vmatpush1.bf16.msra.mxu0 %v1131
        %1174 = vmatprep.subr.bf16.mxu0 0
        %1175 = vmatpush1.bf16.msra.mxu0 %v1132
        %1176 = vmatprep.subr.bf16.mxu0 0
        %1177 = vmatpush1.bf16.msra.mxu0 %v1133
        %1178 = vmatprep.subr.bf16.mxu0 0
        %1179 = vmatpush1.bf16.msra.mxu0 %v1134
        %1180 = vmatprep.subr.bf16.mxu0 0
        %1181 = vmatpush1.bf16.msra.mxu0 %v1135
        %1182 = vmatprep.subr.bf16.mxu0 0
        %1183 = vmatpush1.bf16.msra.mxu0 %v1136
        %1184 = vmatprep.subr.bf16.mxu0 0
        %1185 = vmatpush1.bf16.msra.mxu0 %v1137
        %1186 = vmatprep.mubr.bf16.mxu0 %v1005
        %1187 = vmatmul.mubr.bf16.gmra.mrb[0].mxu0 %v1004
        %v1188 = vpop.f32.mrb[0].mxu0
        %v1189 = vadd.f32 %v1057, %v1188
        %v1190 = vpop.f32.mrb[0].mxu0
        %v1191 = vpop.f32.mrb[0].mxu0
        %v1192 = vadd.f32 %v1057, %v1191
        %v1193 = vpop.f32.mrb[0].mxu0
        %1194 = vmatprep.mubr.bf16.mxu0 %v1007
        %1195 = vmatmul.mubr.bf16.gmra.mrb[0].mxu0 %v1006
        %v1196 = vpop.f32.mrb[0].mxu0
        %v1197 = vadd.f32 %v1057, %v1196
        %v1198 = vpop.f32.mrb[0].mxu0
        %v1199 = vpop.f32.mrb[0].mxu0
        %v1200 = vadd.f32 %v1057, %v1199
        %v1201 = vpop.f32.mrb[0].mxu0
        %1202 = vmatprep.mubr.bf16.mxu0 %v1009
        %1203 = vmatmul.mubr.bf16.gmra.mrb[0].mxu0 %v1008
        %v1204 = vpop.f32.mrb[0].mxu0
        %v1205 = vadd.f32 %v1057, %v1204
        %v1206 = vpop.f32.mrb[0].mxu0
        %v1207 = vpop.f32.mrb[0].mxu0
        %v1208 = vadd.f32 %v1057, %v1207
        %v1209 = vpop.f32.mrb[0].mxu0
        %1210 = vmatprep.mubr.bf16.mxu0 %v1011
        %1211 = vmatmul.mubr.bf16.gmra.mrb[0].mxu0 %v1010
        %v1212 = vpop.f32.mrb[0].mxu0
        %v1213 = vadd.f32 %v1057, %v1212
        %v1214 = vpop.f32.mrb[0].mxu0
        %v1215 = vpop.f32.mrb[0].mxu0
        %v1216 = vadd.f32 %v1057, %v1215
        %v1217 = vpop.f32.mrb[0].mxu0
        %1218 = vmatprep.mubr.bf16.mxu0 %v1013
        %1219 = vmatmul.mubr.bf16.gmra.mrb[0].mxu0 %v1012
        %v1220 = vpop.f32.mrb[0].mxu0
        %v1221 = vadd.f32 %v1057, %v1220
        %v1222 = vpop.f32.mrb[0].mxu0
        %v1223 = vpop.f32.mrb[0].mxu0
        %v1224 = vadd.f32 %v1057, %v1223
        %v1225 = vpop.f32.mrb[0].mxu0
        %1226 = vmatprep.mubr.bf16.mxu0 %v1015
        %1227 = vmatmul.mubr.bf16.gmra.mrb[0].mxu0 %v1014
        %v1228 = vpop.f32.mrb[0].mxu0
        %v1229 = vadd.f32 %v1057, %v1228
        %v1230 = vpop.f32.mrb[0].mxu0
        %v1231 = vpop.f32.mrb[0].mxu0
        %v1232 = vadd.f32 %v1057, %v1231
        %v1233 = vpop.f32.mrb[0].mxu0
        %1234 = vmatprep.mubr.bf16.mxu0 %v1017
        %1235 = vmatmul.mubr.bf16.gmra.mrb[0].mxu0 %v1016
        %v1236 = vpop.f32.mrb[0].mxu0
        %v1237 = vadd.f32 %v1057, %v1236
        %v1238 = vpop.f32.mrb[0].mxu0
        %v1239 = vpop.f32.mrb[0].mxu0
        %v1240 = vadd.f32 %v1057, %v1239
        %v1241 = vpop.f32.mrb[0].mxu0
        %1242 = vmatprep.mubr.bf16.mxu0 %v1019
        %1243 = vmatmul.mubr.bf16.gmra.mrb[0].mxu0 %v1018
        %v1244 = vpop.f32.mrb[0].mxu0
        %v1245 = vadd.f32 %v1057, %v1244
        %v1246 = vpop.f32.mrb[0].mxu0
        %v1247 = vpop.f32.mrb[0].mxu0
        %v1248 = vadd.f32 %v1057, %v1247
        %v1249 = vpop.f32.mrb[0].mxu0
        %1250 = vdwg.mxu0
        %1251 = vst [vmem:[%s340] sm:$0xff] %v1189
        %1252 = vst [vmem:[%s340 + $0x8] sm:$0xff] %v1192
        %1253 = vst [vmem:[%s340 + $0x10] sm:$0xff] %v1197
        %1254 = vst [vmem:[%s340 + $0x18] sm:$0xff] %v1200
        %1255 = vst [vmem:[%s340 + $0x20] sm:$0xff] %v1205
        %1256 = vst [vmem:[%s340 + $0x28] sm:$0xff] %v1208
        %1257 = vst [vmem:[%s340 + $0x30] sm:$0xff] %v1213
        %1258 = vst [vmem:[%s340 + $0x38] sm:$0xff] %v1216
        %1259 = vst [vmem:[%s340 + $0x40] sm:$0xff] %v1221
        %1260 = vst [vmem:[%s340 + $0x48] sm:$0xff] %v1224
        %1261 = vst [vmem:[%s340 + $0x50] sm:$0xff] %v1229
        %1262 = vst [vmem:[%s340 + $0x58] sm:$0xff] %v1232
        %1263 = vst [vmem:[%s340 + $0x60] sm:$0xff] %v1237
        %1264 = vst [vmem:[%s340 + $0x68] sm:$0xff] %v1240
        %1265 = vst [vmem:[%s340 + $0x70] sm:$0xff] %v1245
        %1266 = vst [vmem:[%s340 + $0x78] sm:$0xff] %v1248
        %s1267 = sand.u32 %s186, 1
        %s1268 = scalar_lea.sflag [#allocation4], %s1267
        %s1269 = sand.u32 %s186, 1
        %s1270 = smul.addr %s1269, 128
        %s1271 = scalar_lea.vmem [#allocation10], %s1270
        // Predicated region
        $region65: #{tpu_custom_call.1} parent=47 // pred_check
          %p1272 = pneg %p196
        $region66: #{tpu_custom_call.1} parent=47 // pred_check_branch
          %1274 = sbr.rel (%p1272) target = $region68
        $region67: #{tpu_custom_call.1} parent=47 // pred_region
          %s1275 = smul.u32 16, %s26
          %s1277 = ssub.s32 2048, 2048
          %1278 = vsyncadd %s1268, %s1277
          %s1279 = smul.addr %s1275, 128
          %s1280 = scalar_lea.hbm %s7, %s1279
          %s1281 = sshll.u32 %s1271, 4
          %s1282 = int_to_ptr.vmem [resolvable:$true] %s1281
          %1287 = dma.vmem_to_hbm [thread:$0]  %s1282, 2048, %s1280, %s1268, 128, 128, 8
        $region68: #{tpu_custom_call.1} parent=47 // pred_fallthru
          _
      $region48: #{tpu_custom_call.1} parent=5 // pred_fallthru
        _
      %p1288 = scmp.le.s32.totalorder 2, %s21
      // Predicated region
      $region69: #{tpu_custom_call.1} parent=5 // pred_check
        %p1289 = pneg %p1288
      $region70: #{tpu_custom_call.1} parent=5 // pred_check_branch
        %1291 = sbr.rel (%p1289) target = $region72
      $region71: #{tpu_custom_call.1} parent=5 // pred_region
        %s1292 = ssub.s32 %s21, 2
        // Predicated region
        $region73: #{tpu_custom_call.1} parent=71 // pred_check
          %p1293 = pneg %p202
        $region74: #{tpu_custom_call.1} parent=71 // pred_check_branch
          %1295 = sbr.rel (%p1293) target = $region76
        $region75: #{tpu_custom_call.1} parent=71 // pred_region
          %s1296 = sand.u32 %s187, 1
          %s1297 = scalar_lea.sflag [#allocation4], %s1296
          %s1298 = sand.u32 %s187, 1
          %s1299 = smul.addr %s1298, 128
          %s1300 = scalar_lea.vmem [#allocation10], %s1299
          %1301 = dma.done %s1297, 2048
        $region76: #{tpu_custom_call.1} parent=71 // pred_fallthru
          _
      $region72: #{tpu_custom_call.1} parent=5 // pred_fallthru
        _
    $region6: #{tpu_custom_call.1} parent=1 // loop_footer
      %s25 = sadd.s32 1, %s21
    $region7: #{tpu_custom_call.1} parent=1 // loop_footer_branch
      %20 = sbr.rel target = $region3
    $region8: #{tpu_custom_call.1} parent=1 // loop_exit
      _
    %1302 = vsyncpa [#allocation3], 1
    %s1303 = scalar_lea.sflag [#allocation3], 1
    %1304 = vsyncpa %s1303, 1
    %1305 = vsyncpa [#allocation6], 1
    %1306 = vsyncpa [#allocation9], 1
    %1307 = vsyncpa [#allocation4], 1
    %s1308 = scalar_lea.sflag [#allocation4], 1
    %1309 = vsyncpa %s1308, 1

// kernel: tpu_custom_call.1
$region0: #{tpu_custom_call.1}
  #allocation0 [shape = 'u32[]', space=smem, size = 0x4, offset = 0x4, fixed_abs, tag = 'smem constant byte address 0x4 - core index']
  #allocation1 [shape = 'u32[144,128]{1,0:T(1,128)}', space=vmem, size = 0x12000, scoped, tag = 'internal scratch']
  %s0 = inlined_call_operand.hbm [shape: f32[256,128], index: 0, kind: input, shape index: {}]
  %s1 = inlined_call_operand.hbm [shape: bf16[128,256], index: 1, kind: input, shape index: {}]
  %s2 = inlined_call_operand.vmem [shape: bf16[1,256], index: 2, kind: input, shape index: {}]
  %s3 = inlined_call_operand.hbm [shape: bf16[256,256], index: 3, kind: input, shape index: {}]
  %s4 = inlined_call_operand.vmem [shape: bf16[1,256], index: 4, kind: input, shape index: {}]
  %s5 = inlined_call_operand.hbm [shape: bf16[256,128], index: 5, kind: input, shape index: {}]
  %s6 = inlined_call_operand.vmem [shape: bf16[1,128], index: 6, kind: input, shape index: {}]
  %s7 = inlined_call_operand.hbm [shape: f32[256,128], index: 7, kind: output, shape index: {}]
  %s8 = sld [smem:[#allocation0]]
  $region77: #{tpu_custom_call.1} parent=0
    _
  %s10 = ssub.s32 1, %s8
  %s11 = scalar_select 0, %s10, %s8
  $region1: #{tpu_custom_call.1} parent=0
    #allocation2 [shape = 'u8[131072]{0}', space=vmem, size = 0x20000, scoped, tag = 'input window, operand 0']
    #allocation3 [shape = 's32[2]{0}', space=sflag, size = 0x8, scoped, tag = 'scoped memory for tpu_custom_call.1']
    #allocation4 [shape = 's32[2]{0}', space=sflag, size = 0x8, scoped, tag = 'scoped memory for tpu_custom_call.1']
    #allocation5 [shape = 'u8[65536]{0}', space=vmem, size = 0x10000, scoped, tag = 'input window, operand 1, single buffered']
    #allocation6 [shape = 's32[1]{0}', space=sflag, size = 0x4, scoped, tag = 'scoped memory for tpu_custom_call.1']
    #allocation7 [shape = 'u8[131072]{0}', space=vmem, size = 0x20000, scoped, tag = 'input window, operand 3, single buffered']
    #allocation8 [shape = 'u8[65536]{0}', space=vmem, size = 0x10000, scoped, tag = 'input window, operand 5, single buffered']
    #allocation9 [shape = 's32[1]{0}', space=sflag, size = 0x4, scoped, tag = 'scoped memory for tpu_custom_call.1']
    #allocation10 [shape = 'u8[131072]{0}', space=vmem, size = 0x20000, scoped, tag = 'output window, operand 0']
    %12 = vsyncpa [#allocation3], 0
    %s13 = scalar_lea.sflag [#allocation3], 1
    %14 = vsyncpa %s13, 0
    %15 = vsyncpa [#allocation6], 0
    %16 = vsyncpa [#allocation9], 0
    %17 = vsyncpa [#allocation4], 0
    %s18 = scalar_lea.sflag [#allocation4], 1
    %19 = vsyncpa %s18, 0
    loop: start=0, step=1, limit=4
    $region2: #{tpu_custom_call.1} parent=1 // loop_pre_header
      _
    $region3: #{tpu_custom_call.1} parent=1 // loop_header
      %s21 = sphi 0, %s25
      %p22 = scmp.ge.s32.totalorder %s21, 4
      %s31 = sphi 0, %s33
      %s34 = sphi 0, %s31
      %s35 = sphi 0, %s34
      %s51 = sphi 0, %s35
      %s55 = sphi 0, %s55
      %s57 = sphi 0, %s55
      %s58 = sphi 0, %s57
      %s72 = sphi 0, %s58
      %s76 = sphi 0, %s76
      %s78 = sphi 0, %s76
      %s79 = sphi 0, %s78
      %s93 = sphi 0, %s79
      %s97 = sphi 0, %s97
      %s99 = sphi 0, %s97
      %s100 = sphi 0, %s99
      %s114 = sphi 0, %s100
      %s118 = sphi 0, %s118
      %s120 = sphi 0, %s118
      %s121 = sphi 0, %s120
      %s135 = sphi 0, %s121
      %s139 = sphi 0, %s139
      %s141 = sphi 0, %s139
      %s142 = sphi 0, %s141
      %s156 = sphi 0, %s142
      %s160 = sphi 0, %s160
      %s162 = sphi 0, %s160
      %s163 = sphi 0, %s162
      %s177 = sphi 0, %s163
      %s183 = sphi 0, %s185
      %s186 = sphi 0, %s183
      %s187 = sphi 0, %s186
      %s203 = sphi 0, %s187
    $region4: #{tpu_custom_call.1} parent=1 // loop_header_branch
      %24 = sbr.rel (%p22) target = $region8
    $region5: #{tpu_custom_call.1} parent=1 // loop_body
      %s26 = ssub.s32 %s21, 1
      %s27 = ssub.s32 %s21, 2
      %s28 = sadd.s32 %s21, 1
      %s29 = ssub.s32 %s21, %s28
      %p30 = scmp.eq.s32.totalorder %s29, 0
      %s32 = sadd.s32 %s31, 1
      %s33 = scalar_select %p30, %s31, %s32
      %p36 = pneg %p30
      %p37 = scmp.eq.s32.totalorder %s21, 1
      %p38 = por %p36, %p37
      %p39 = scmp.ne.s32.totalorder %s31, %s34
      %p40 = scmp.eq.s32.totalorder %s21, 0
      %p41 = por %p39, %p40
      %p42 = scmp.ne.s32.totalorder %s31, %s34
      %p43 = scmp.eq.s32.totalorder %s26, 1
      %p44 = por %p42, %p43
      %p45 = scmp.ne.s32.totalorder %s34, %s35
      %p46 = scmp.eq.s32.totalorder %s26, 0
      %p47 = por %p45, %p46
      %p48 = scmp.ne.s32.totalorder %s34, %s35
      %p49 = scmp.eq.s32.totalorder %s27, 1
      %p50 = por %p48, %p49
      %p52 = scmp.ne.s32.totalorder %s35, %s51
      %p53 = scmp.eq.s32.totalorder %s27, 0
      %p54 = por %p52, %p53
      %s56 = sadd.s32 %s55, 1
      %p59 = scmp.eq.s32.totalorder %s21, 1
      %p60 = scmp.ne.s32.totalorder %s55, %s57
      %p61 = scmp.eq.s32.totalorder %s21, 0
      %p62 = por %p60, %p61
      %p63 = scmp.ne.s32.totalorder %s55, %s57
      %p64 = scmp.eq.s32.totalorder %s26, 1
      %p65 = por %p63, %p64
      %p66 = scmp.ne.s32.totalorder %s57, %s58
      %p67 = scmp.eq.s32.totalorder %s26, 0
      %p68 = por %p66, %p67
      %p69 = scmp.ne.s32.totalorder %s57, %s58
      %p70 = scmp.eq.s32.totalorder %s27, 1
      %p71 = por %p69, %p70
      %p73 = scmp.ne.s32.totalorder %s58, %s72
      %p74 = scmp.eq.s32.totalorder %s27, 0
      %p75 = por %p73, %p74
      %s77 = sadd.s32 %s76, 1
      %p80 = scmp.eq.s32.totalorder %s21, 1
      %p81 = scmp.ne.s32.totalorder %s76, %s78
      %p82 = scmp.eq.s32.totalorder %s21, 0
      %p83 = por %p81, %p82
      %p84 = scmp.ne.s32.totalorder %s76, %s78
      %p85 = scmp.eq.s32.totalorder %s26, 1
      %p86 = por %p84, %p85
      %p87 = scmp.ne.s32.totalorder %s78, %s79
      %p88 = scmp.eq.s32.totalorder %s26, 0
      %p89 = por %p87, %p88
      %p90 = scmp.ne.s32.totalorder %s78, %s79
      %p91 = scmp.eq.s32.totalorder %s27, 1
      %p92 = por %p90, %p91
      %p94 = scmp.ne.s32.totalorder %s79, %s93
      %p95 = scmp.eq.s32.totalorder %s27, 0
      %p96 = por %p94, %p95
      %s98 = sadd.s32 %s97, 1
      %p101 = scmp.eq.s32.totalorder %s21, 1
      %p102 = scmp.ne.s32.totalorder %s97, %s99
      %p103 = scmp.eq.s32.totalorder %s21, 0
      %p104 = por %p102, %p103
      %p105 = scmp.ne.s32.totalorder %s97, %s99
      %p106 = scmp.eq.s32.totalorder %s26, 1
      %p107 = por %p105, %p106
      %p108 = scmp.ne.s32.totalorder %s99, %s100
      %p109 = scmp.eq.s32.totalorder %s26, 0
      %p110 = por %p108, %p109
      %p111 = scmp.ne.s32.totalorder %s99, %s100
      %p112 = scmp.eq.s32.totalorder %s27, 1
      %p113 = por %p111, %p112
      %p115 = scmp.ne.s32.totalorder %s100, %s114
      %p116 = scmp.eq.s32.totalorder %s27, 0
      %p117 = por %p115, %p116
      %s119 = sadd.s32 %s118, 1
      %p122 = scmp.eq.s32.totalorder %s21, 1
      %p123 = scmp.ne.s32.totalorder %s118, %s120
      %p124 = scmp.eq.s32.totalorder %s21, 0
      %p125 = por %p123, %p124
      %p126 = scmp.ne.s32.totalorder %s118, %s120
      %p127 = scmp.eq.s32.totalorder %s26, 1
      %p128 = por %p126, %p127
      %p129 = scmp.ne.s32.totalorder %s120, %s121
      %p130 = scmp.eq.s32.totalorder %s26, 0
      %p131 = por %p129, %p130
      %p132 = scmp.ne.s32.totalorder %s120, %s121
      %p133 = scmp.eq.s32.totalorder %s27, 1
      %p134 = por %p132, %p133
      %p136 = scmp.ne.s32.totalorder %s121, %s135
      %p137 = scmp.eq.s32.totalorder %s27, 0
      %p138 = por %p136, %p137
      %s140 = sadd.s32 %s139, 1
      %p143 = scmp.eq.s32.totalorder %s21, 1
      %p144 = scmp.ne.s32.totalorder %s139, %s141
      %p145 = scmp.eq.s32.totalorder %s21, 0
      %p146 = por %p144, %p145
      %p147 = scmp.ne.s32.totalorder %s139, %s141
      %p148 = scmp.eq.s32.totalorder %s26, 1
      %p149 = por %p147, %p148
      %p150 = scmp.ne.s32.totalorder %s141, %s142
      %p151 = scmp.eq.s32.totalorder %s26, 0
      %p152 = por %p150, %p151
      %p153 = scmp.ne.s32.totalorder %s141, %s142
      %p154 = scmp.eq.s32.totalorder %s27, 1
      %p155 = por %p153, %p154
      %p157 = scmp.ne.s32.totalorder %s142, %s156
      %p158 = scmp.eq.s32.totalorder %s27, 0
      %p159 = por %p157, %p158
      %s161 = sadd.s32 %s160, 1
      %p164 = scmp.eq.s32.totalorder %s21, 1
      %p165 = scmp.ne.s32.totalorder %s160, %s162
      %p166 = scmp.eq.s32.totalorder %s21, 0
      %p167 = por %p165, %p166
      %p168 = scmp.ne.s32.totalorder %s160, %s162
      %p169 = scmp.eq.s32.totalorder %s26, 1
      %p170 = por %p168, %p169
      %p171 = scmp.ne.s32.totalorder %s162, %s163
      %p172 = scmp.eq.s32.totalorder %s26, 0
      %p173 = por %p171, %p172
      %p174 = scmp.ne.s32.totalorder %s162, %s163
      %p175 = scmp.eq.s32.totalorder %s27, 1
      %p176 = por %p174, %p175
      %p178 = scmp.ne.s32.totalorder %s163, %s177
      %p179 = scmp.eq.s32.totalorder %s27, 0
      %p180 = por %p178, %p179
      %s181 = ssub.s32 %s21, %s28
      %p182 = scmp.eq.s32.totalorder %s181, 0
      %s184 = sadd.s32 %s183, 1
      %s185 = scalar_select %p182, %s183, %s184
      %p188 = pneg %p182
      %p189 = scmp.eq.s32.totalorder %s21, 1
      %p190 = por %p188, %p189
      %p191 = scmp.ne.s32.totalorder %s183, %s186
      %p192 = scmp.eq.s32.totalorder %s21, 0
      %p193 = por %p191, %p192
      %p194 = scmp.ne.s32.totalorder %s183, %s186
      %p195 = scmp.eq.s32.totalorder %s26, 1
      %p196 = por %p194, %p195
      %p197 = scmp.ne.s32.totalorder %s186, %s187
      %p198 = scmp.eq.s32.totalorder %s26, 0
      %p199 = por %p197, %p198
      %p200 = scmp.ne.s32.totalorder %s186, %s187
      %p201 = scmp.eq.s32.totalorder %s27, 1
      %p202 = por %p200, %p201
      %p204 = scmp.ne.s32.totalorder %s187, %s203
      %p205 = scmp.eq.s32.totalorder %s27, 0
      %p206 = por %p204, %p205
      %p207 = scmp.le.s32.totalorder 1, %s21
      %p208 = scmp.lt.s32.totalorder %s21, 3
      %p209 = pnand %p207, %p208
      %p210 = pneg %p209
      // Predicated region
      $region9: #{tpu_custom_call.1} parent=5 // pred_check
        _
      $region10: #{tpu_custom_call.1} parent=5 // pred_check_branch
        %212 = sbr.rel (%p209) target = $region12
      $region11: #{tpu_custom_call.1} parent=5 // pred_region
        %s213 = ssub.s32 %s21, 1
        // Predicated region
        $region13: #{tpu_custom_call.1} parent=11 // pred_check
          %p214 = pneg %p68
        $region14: #{tpu_custom_call.1} parent=11 // pred_check_branch
          %216 = sbr.rel (%p214) target = $region16
        $region15: #{tpu_custom_call.1} parent=11 // pred_region
          %s218 = ssub.s32 2048, 2048
          %219 = vsyncadd [#allocation6], %s218
          %s220 = sshll.u32 [#allocation5], 4
          %s221 = int_to_ptr.vmem [resolvable:$true] %s220
          %226 = dma.hbm_to_vmem [thread:$0]  %s1, 2048, %s221, [#allocation6], 128, 128, 8
        $region16: #{tpu_custom_call.1} parent=11 // pred_fallthru
          _
        // Predicated region
        $region17: #{tpu_custom_call.1} parent=11 // pred_check
          %p227 = pneg %p89
        $region18: #{tpu_custom_call.1} parent=11 // pred_check_branch
          %229 = sbr.rel (%p227) target = $region20
        $region19: #{tpu_custom_call.1} parent=11 // pred_region
          _
        $region20: #{tpu_custom_call.1} parent=11 // pred_fallthru
          _
        // Predicated region
        $region21: #{tpu_custom_call.1} parent=11 // pred_check
          %p230 = pneg %p110
        $region22: #{tpu_custom_call.1} parent=11 // pred_check_branch
          %232 = sbr.rel (%p230) target = $region24
        $region23: #{tpu_custom_call.1} parent=11 // pred_region
          %s234 = ssub.s32 4096, 4096
          %235 = vsyncadd [#allocation6], %s234
          %s236 = sshll.u32 [#allocation7], 4
          %s237 = int_to_ptr.vmem [resolvable:$true] %s236
          %242 = dma.hbm_to_vmem [thread:$0]  %s3, 4096, %s237, [#allocation6], 128, 128, 8
        $region24: #{tpu_custom_call.1} parent=11 // pred_fallthru
          _
        // Predicated region
        $region25: #{tpu_custom_call.1} parent=11 // pred_check
          %p243 = pneg %p131
        $region26: #{tpu_custom_call.1} parent=11 // pred_check_branch
          %245 = sbr.rel (%p243) target = $region28
        $region27: #{tpu_custom_call.1} parent=11 // pred_region
          _
        $region28: #{tpu_custom_call.1} parent=11 // pred_fallthru
          _
        // Predicated region
        $region29: #{tpu_custom_call.1} parent=11 // pred_check
          %p246 = pneg %p152
        $region30: #{tpu_custom_call.1} parent=11 // pred_check_branch
          %248 = sbr.rel (%p246) target = $region32
        $region31: #{tpu_custom_call.1} parent=11 // pred_region
          %s250 = ssub.s32 2048, 2048
          %251 = vsyncadd [#allocation9], %s250
          %s252 = sshll.u32 [#allocation8], 4
          %s253 = int_to_ptr.vmem [resolvable:$true] %s252
          %258 = dma.hbm_to_vmem [thread:$0]  %s5, 2048, %s253, [#allocation9], 64, 64, 4
        $region32: #{tpu_custom_call.1} parent=11 // pred_fallthru
          _
        // Predicated region
        $region33: #{tpu_custom_call.1} parent=11 // pred_check
          %p259 = pneg %p173
        $region34: #{tpu_custom_call.1} parent=11 // pred_check_branch
          %261 = sbr.rel (%p259) target = $region36
        $region35: #{tpu_custom_call.1} parent=11 // pred_region
          _
        $region36: #{tpu_custom_call.1} parent=11 // pred_fallthru
          _
      $region12: #{tpu_custom_call.1} parent=5 // pred_fallthru
        _
      %p262 = scmp.lt.s32.totalorder %s21, 2
      // Predicated region
      $region37: #{tpu_custom_call.1} parent=5 // pred_check
        %p263 = pneg %p262
      $region38: #{tpu_custom_call.1} parent=5 // pred_check_branch
        %265 = sbr.rel (%p263) target = $region40
      $region39: #{tpu_custom_call.1} parent=5 // pred_region
        // Predicated region
        $region41: #{tpu_custom_call.1} parent=39 // pred_check
          %p266 = pneg %p41
        $region42: #{tpu_custom_call.1} parent=39 // pred_check_branch
          %268 = sbr.rel (%p266) target = $region44
        $region43: #{tpu_custom_call.1} parent=39 // pred_region
          %s269 = sand.u32 %s31, 1
          %s270 = scalar_lea.sflag [#allocation3], %s269
          %s271 = sand.u32 %s31, 1
          %s272 = smul.addr %s271, 128
          %s273 = scalar_lea.vmem [#allocation2], %s272
          %s274 = smul.u32 16, %s21
          %s276 = ssub.s32 2048, 2048
          %277 = vsyncadd %s270, %s276
          %s278 = smul.addr %s274, 128
          %s279 = scalar_lea.hbm %s0, %s278
          %s280 = sshll.u32 %s273, 4
          %s281 = int_to_ptr.vmem [resolvable:$true] %s280
          %286 = dma.hbm_to_vmem [thread:$0]  %s279, 2048, %s281, %s270, 128, 128, 8
        $region44: #{tpu_custom_call.1} parent=39 // pred_fallthru
          _
      $region40: #{tpu_custom_call.1} parent=5 // pred_fallthru
        _
      %p287 = scmp.le.s32.totalorder 1, %s21
      %p288 = scmp.lt.s32.totalorder %s21, 3
      %p289 = pnand %p287, %p288
      %p290 = pneg %p289
      // Predicated region
      $region45: #{tpu_custom_call.1} parent=5 // pred_check
        _
      $region46: #{tpu_custom_call.1} parent=5 // pred_check_branch
        %292 = sbr.rel (%p289) target = $region48
      $region47: #{tpu_custom_call.1} parent=5 // pred_region
        %s293 = ssub.s32 %s21, 1
        %s294 = sand.u32 %s34, 1
        %s295 = scalar_lea.sflag [#allocation3], %s294
        %s296 = sand.u32 %s34, 1
        %s297 = smul.addr %s296, 128
        %s298 = scalar_lea.vmem [#allocation2], %s297
        // Predicated region
        $region49: #{tpu_custom_call.1} parent=47 // pred_check
          %p299 = pneg %p47
        $region50: #{tpu_custom_call.1} parent=47 // pred_check_branch
          %301 = sbr.rel (%p299) target = $region52
        $region51: #{tpu_custom_call.1} parent=47 // pred_region
          %302 = dma.done %s295, 2048
        $region52: #{tpu_custom_call.1} parent=47 // pred_fallthru
          _
        // Predicated region
        $region53: #{tpu_custom_call.1} parent=47 // pred_check
          %p303 = pneg %p68
        $region54: #{tpu_custom_call.1} parent=47 // pred_check_branch
          %305 = sbr.rel (%p303) target = $region56
        $region55: #{tpu_custom_call.1} parent=47 // pred_region
          %306 = dma.done [#allocation6], 2048
        $region56: #{tpu_custom_call.1} parent=47 // pred_fallthru
          _
        // Predicated region
        $region57: #{tpu_custom_call.1} parent=47 // pred_check
          %p307 = pneg %p110
        $region58: #{tpu_custom_call.1} parent=47 // pred_check_branch
          %309 = sbr.rel (%p307) target = $region60
        $region59: #{tpu_custom_call.1} parent=47 // pred_region
          %310 = dma.done [#allocation6], 4096
        $region60: #{tpu_custom_call.1} parent=47 // pred_fallthru
          _
        // Predicated region
        $region61: #{tpu_custom_call.1} parent=47 // pred_check
          %p311 = pneg %p152
        $region62: #{tpu_custom_call.1} parent=47 // pred_check_branch
          %313 = sbr.rel (%p311) target = $region64
        $region63: #{tpu_custom_call.1} parent=47 // pred_region
          %314 = dma.done [#allocation9], 2048
        $region64: #{tpu_custom_call.1} parent=47 // pred_fallthru
          _
        %s315 = sand.u32 %s34, 1
        %s316 = scalar_lea.sflag [#allocation3], %s315
        %s317 = sand.u32 %s34, 1
        %s318 = smul.addr %s317, 128
        %s319 = scalar_lea.vmem [#allocation2], %s318
        %p320 = pneg %p47
        %p321 = pneg %p44
        %p322 = pneg %p68
        %p323 = pneg %p65
        %p324 = pneg %p89
        %p325 = pneg %p86
        %p326 = pneg %p110
        %p327 = pneg %p107
        %p328 = pneg %p131
        %p329 = pneg %p128
        %p330 = pneg %p152
        %p331 = pneg %p149
        %p332 = pneg %p173
        %p333 = pneg %p170
        %p334 = pneg %p199
        %p335 = pneg %p196
        %s336 = sand.u32 %s186, 1
        %s337 = scalar_lea.sflag [#allocation4], %s336
        %s338 = sand.u32 %s186, 1
        %s339 = smul.addr %s338, 128
        %s340 = scalar_lea.vmem [#allocation10], %s339
        %s341 = smul.u32 16, %s26
        %s342 = smul.u32 16, %s26
        %v344 = vld [vmem:[%s298] sm:$0xff]
        %v345 = vld [vmem:[%s298 + $0x8] sm:$0xff]
        %v346 = vld [vmem:[%s298 + $0x10] sm:$0xff]
        %v347 = vld [vmem:[%s298 + $0x18] sm:$0xff]
        %v348 = vld [vmem:[%s298 + $0x20] sm:$0xff]
        %v349 = vld [vmem:[%s298 + $0x28] sm:$0xff]
        %v350 = vld [vmem:[%s298 + $0x30] sm:$0xff]
        %v351 = vld [vmem:[%s298 + $0x38] sm:$0xff]
        %v352 = vld [vmem:[%s298 + $0x40] sm:$0xff]
        %v353 = vld [vmem:[%s298 + $0x48] sm:$0xff]
        %v354 = vld [vmem:[%s298 + $0x50] sm:$0xff]
        %v355 = vld [vmem:[%s298 + $0x58] sm:$0xff]
        %v356 = vld [vmem:[%s298 + $0x60] sm:$0xff]
        %v357 = vld [vmem:[%s298 + $0x68] sm:$0xff]
        %v358 = vld [vmem:[%s298 + $0x70] sm:$0xff]
        %v359 = vld [vmem:[%s298 + $0x78] sm:$0xff]
        %v360 = vpack.c.bf16 %v345, %v344
        %v361 = vpack.c.bf16 %v347, %v346
        %v362 = vpack.c.bf16 %v349, %v348
        %v363 = vpack.c.bf16 %v351, %v350
        %v364 = vpack.c.bf16 %v353, %v352
        %v365 = vpack.c.bf16 %v355, %v354
        %v366 = vpack.c.bf16 %v357, %v356
        %v367 = vpack.c.bf16 %v359, %v358
        %v368 = vld [vmem:[#allocation5] sm:$0xff]
        %v369 = vld [vmem:[#allocation5 + $0x8] sm:$0xff]
        %v370 = vld [vmem:[#allocation5 + $0x10] sm:$0xff]
        %v371 = vld [vmem:[#allocation5 + $0x18] sm:$0xff]
        %v372 = vld [vmem:[#allocation5 + $0x20] sm:$0xff]
        %v373 = vld [vmem:[#allocation5 + $0x28] sm:$0xff]
        %v374 = vld [vmem:[#allocation5 + $0x30] sm:$0xff]
        %v375 = vld [vmem:[#allocation5 + $0x38] sm:$0xff]
        %v376 = vld [vmem:[#allocation5 + $0x40] sm:$0xff]
        %v377 = vld [vmem:[#allocation5 + $0x48] sm:$0xff]
        %v378 = vld [vmem:[#allocation5 + $0x50] sm:$0xff]
        %v379 = vld [vmem:[#allocation5 + $0x58] sm:$0xff]
        %v380 = vld [vmem:[#allocation5 + $0x60] sm:$0xff]
        %v381 = vld [vmem:[#allocation5 + $0x68] sm:$0xff]
        %v382 = vld [vmem:[#allocation5 + $0x70] sm:$0xff]
        %v383 = vld [vmem:[#allocation5 + $0x78] sm:$0xff]
        %v384 = vld [vmem:[%s2] sm:$0x3]
        %v385 = vunpack.c.l.bf16 %v384
        %v387 = vlaneseq
        %v388 = vshrl.u32 %v387, 7
        %v389 = vsub.s32 0, %v388
        %v390 = vrot.slane %v385, %v389
        %v391 = vlaneseq
        %v392 = vshrl.u32 %v391, 7
        %v393 = vsub.s32 2, %v392
        %v394 = vrot.slane %v385, %v393
        %v397 = vlaneseq
        %v398 = vshrl.u32 %v397, 7
        %v399 = vsub.s32 0, %v398
        %v400 = vrot.slane %v390, %v399
        %v401 = vlaneseq
        %v402 = vshrl.u32 %v401, 7
        %v403 = vsub.s32 0, %v402
        %v404 = vrot.slane %v394, %v403
        %v421 = vunpack.c.l.b16 %v368
        %v422 = vunpack.c.h.b16 %v368
        %v423 = vunpack.c.l.b16 %v369
        %v424 = vunpack.c.h.b16 %v369
        %v425 = vunpack.c.l.b16 %v370
        %v426 = vunpack.c.h.b16 %v370
        %v427 = vunpack.c.l.b16 %v371
        %v428 = vunpack.c.h.b16 %v371
        %v429 = vunpack.c.l.b16 %v372
        %v430 = vunpack.c.h.b16 %v372
        %v431 = vunpack.c.l.b16 %v373
        %v432 = vunpack.c.h.b16 %v373
        %v433 = vunpack.c.l.b16 %v374
        %v434 = vunpack.c.h.b16 %v374
        %v435 = vunpack.c.l.b16 %v375
        %v436 = vunpack.c.h.b16 %v375
        %v437 = vunpack.c.l.b16 %v376
        %v438 = vunpack.c.h.b16 %v376
        %v439 = vunpack.c.l.b16 %v377
        %v440 = vunpack.c.h.b16 %v377
        %v441 = vunpack.c.l.b16 %v378
        %v442 = vunpack.c.h.b16 %v378
        %v443 = vunpack.c.l.b16 %v379
        %v444 = vunpack.c.h.b16 %v379
        %v445 = vunpack.c.l.b16 %v380
        %v446 = vunpack.c.h.b16 %v380
        %v447 = vunpack.c.l.b16 %v381
        %v448 = vunpack.c.h.b16 %v381
        %v449 = vunpack.c.l.b16 %v382
        %v450 = vunpack.c.h.b16 %v382
        %v451 = vunpack.c.l.b16 %v383
        %v452 = vunpack.c.h.b16 %v383
        %v453 = vpack.c.b16 %v423, %v421
        %v454 = vpack.c.b16 %v424, %v422
        %v455 = vpack.c.b16 %v427, %v425
        %v456 = vpack.c.b16 %v428, %v426
        %v457 = vpack.c.b16 %v431, %v429
        %v458 = vpack.c.b16 %v432, %v430
        %v459 = vpack.c.b16 %v435, %v433
        %v460 = vpack.c.b16 %v436, %v434
        %v461 = vpack.c.b16 %v439, %v437
        %v462 = vpack.c.b16 %v440, %v438
        %v463 = vpack.c.b16 %v443, %v441
        %v464 = vpack.c.b16 %v444, %v442
        %v465 = vpack.c.b16 %v447, %v445
        %v466 = vpack.c.b16 %v448, %v446
        %v467 = vpack.c.b16 %v451, %v449
        %v468 = vpack.c.b16 %v452, %v450
        %485 = vmatprep.subr.bf16.mxu0 %v454
        %486 = vmatpush1.bf16.msra.mxu0 %v453
        %487 = vmatprep.subr.bf16.mxu0 %v456
        %488 = vmatpush1.bf16.msra.mxu0 %v455
        %489 = vmatprep.subr.bf16.mxu0 %v458
        %490 = vmatpush1.bf16.msra.mxu0 %v457
        %491 = vmatprep.subr.bf16.mxu0 %v460
        %492 = vmatpush1.bf16.msra.mxu0 %v459
        %493 = vmatprep.subr.bf16.mxu0 %v462
        %494 = vmatpush1.bf16.msra.mxu0 %v461
        %495 = vmatprep.subr.bf16.mxu0 %v464
        %496 = vmatpush1.bf16.msra.mxu0 %v463
        %497 = vmatprep.subr.bf16.mxu0 %v466
        %498 = vmatpush1.bf16.msra.mxu0 %v465
        %499 = vmatprep.subr.bf16.mxu0 %v468
        %500 = vmatpush1.bf16.msra.mxu0 %v467
        %501 = vmatprep.subr.bf16.mxu0 0
        %502 = vmatpush1.bf16.msra.mxu0 0
        %503 = vmatprep.subr.bf16.mxu0 0
        %504 = vmatpush1.bf16.msra.mxu0 0
        %505 = vmatprep.subr.bf16.mxu0 0
        %506 = vmatpush1.bf16.msra.mxu0 0
        %507 = vmatprep.subr.bf16.mxu0 0
        %508 = vmatpush1.bf16.msra.mxu0 0
        %509 = vmatprep.subr.bf16.mxu0 0
        %510 = vmatpush1.bf16.msra.mxu0 0
        %511 = vmatprep.subr.bf16.mxu0 0
        %512 = vmatpush1.bf16.msra.mxu0 0
        %513 = vmatprep.subr.bf16.mxu0 0
        %514 = vmatpush1.bf16.msra.mxu0 0
        %515 = vmatprep.subr.bf16.mxu0 0
        %516 = vmatpush1.bf16.msra.mxu0 0
        %517 = vmatprep.mubr.bf16.mxu0 0
        %518 = vmatmul.mubr.bf16.gmra.mrb[0].mxu0 %v360
        %v519 = vpop.f32.mrb[0].mxu0
        %v520 = vadd.f32 %v400, %v519
        %v521 = vpop.f32.mrb[0].mxu0
        %v522 = vadd.f32 %v404, %v521
        %v523 = vpop.f32.mrb[0].mxu0
        %v524 = vadd.f32 %v400, %v523
        %v525 = vpop.f32.mrb[0].mxu0
        %v526 = vadd.f32 %v404, %v525
        %527 = vmatprep.mubr.bf16.mxu0 0
        %528 = vmatmul.mubr.bf16.gmra.mrb[0].mxu0 %v361
        %v529 = vpop.f32.mrb[0].mxu0
        %v530 = vadd.f32 %v400, %v529
        %v531 = vpop.f32.mrb[0].mxu0
        %v532 = vadd.f32 %v404, %v531
        %v533 = vpop.f32.mrb[0].mxu0
        %v534 = vadd.f32 %v400, %v533
        %v535 = vpop.f32.mrb[0].mxu0
        %v536 = vadd.f32 %v404, %v535
        %537 = vmatprep.mubr.bf16.mxu0 0
        %538 = vmatmul.mubr.bf16.gmra.mrb[0].mxu0 %v362
        %v539 = vpop.f32.mrb[0].mxu0
        %v540 = vadd.f32 %v400, %v539
        %v541 = vpop.f32.mrb[0].mxu0
        %v542 = vadd.f32 %v404, %v541
        %v543 = vpop.f32.mrb[0].mxu0
        %v544 = vadd.f32 %v400, %v543
        %v545 = vpop.f32.mrb[0].mxu0
        %v546 = vadd.f32 %v404, %v545
        %547 = vmatprep.mubr.bf16.mxu0 0
        %548 = vmatmul.mubr.bf16.gmra.mrb[0].mxu0 %v363
        %v549 = vpop.f32.mrb[0].mxu0
        %v550 = vadd.f32 %v400, %v549
        %v551 = vpop.f32.mrb[0].mxu0
        %v552 = vadd.f32 %v404, %v551
        %v553 = vpop.f32.mrb[0].mxu0
        %v554 = vadd.f32 %v400, %v553
        %v555 = vpop.f32.mrb[0].mxu0
        %v556 = vadd.f32 %v404, %v555
        %557 = vmatprep.mubr.bf16.mxu0 0
        %558 = vmatmul.mubr.bf16.gmra.mrb[0].mxu0 %v364
        %v559 = vpop.f32.mrb[0].mxu0
        %v560 = vadd.f32 %v400, %v559
        %v561 = vpop.f32.mrb[0].mxu0
        %v562 = vadd.f32 %v404, %v561
        %v563 = vpop.f32.mrb[0].mxu0
        %v564 = vadd.f32 %v400, %v563
        %v565 = vpop.f32.mrb[0].mxu0
        %v566 = vadd.f32 %v404, %v565
        %567 = vmatprep.mubr.bf16.mxu0 0
        %568 = vmatmul.mubr.bf16.gmra.mrb[0].mxu0 %v365
        %v569 = vpop.f32.mrb[0].mxu0
        %v570 = vadd.f32 %v400, %v569
        %v571 = vpop.f32.mrb[0].mxu0
        %v572 = vadd.f32 %v404, %v571
        %v573 = vpop.f32.mrb[0].mxu0
        %v574 = vadd.f32 %v400, %v573
        %v575 = vpop.f32.mrb[0].mxu0
        %v576 = vadd.f32 %v404, %v575
        %577 = vmatprep.mubr.bf16.mxu0 0
        %578 = vmatmul.mubr.bf16.gmra.mrb[0].mxu0 %v366
        %v579 = vpop.f32.mrb[0].mxu0
        %v580 = vadd.f32 %v400, %v579
        %v581 = vpop.f32.mrb[0].mxu0
        %v582 = vadd.f32 %v404, %v581
        %v583 = vpop.f32.mrb[0].mxu0
        %v584 = vadd.f32 %v400, %v583
        %v585 = vpop.f32.mrb[0].mxu0
        %v586 = vadd.f32 %v404, %v585
        %587 = vmatprep.mubr.bf16.mxu0 0
        %588 = vmatmul.mubr.bf16.gmra.mrb[0].mxu0 %v367
        %v589 = vpop.f32.mrb[0].mxu0
        %v590 = vadd.f32 %v400, %v589
        %v591 = vpop.f32.mrb[0].mxu0
        %v592 = vadd.f32 %v404, %v591
        %v593 = vpop.f32.mrb[0].mxu0
        %v594 = vadd.f32 %v400, %v593
        %v595 = vpop.f32.mrb[0].mxu0
        %v596 = vadd.f32 %v404, %v595
        %597 = vdwg.mxu0
        %v598 = vmax.f32 %v520, 0.0
        %v599 = vmax.f32 %v522, 0.0
        %v600 = vmax.f32 %v524, 0.0
        %v601 = vmax.f32 %v526, 0.0
        %v602 = vmax.f32 %v530, 0.0
        %v603 = vmax.f32 %v532, 0.0
        %v604 = vmax.f32 %v534, 0.0
        %v605 = vmax.f32 %v536, 0.0
        %v606 = vmax.f32 %v540, 0.0
        %v607 = vmax.f32 %v542, 0.0
        %v608 = vmax.f32 %v544, 0.0
        %v609 = vmax.f32 %v546, 0.0
        %v610 = vmax.f32 %v550, 0.0
        %v611 = vmax.f32 %v552, 0.0
        %v612 = vmax.f32 %v554, 0.0
        %v613 = vmax.f32 %v556, 0.0
        %v614 = vmax.f32 %v560, 0.0
        %v615 = vmax.f32 %v562, 0.0
        %v616 = vmax.f32 %v564, 0.0
        %v617 = vmax.f32 %v566, 0.0
        %v618 = vmax.f32 %v570, 0.0
        %v619 = vmax.f32 %v572, 0.0
        %v620 = vmax.f32 %v574, 0.0
        %v621 = vmax.f32 %v576, 0.0
        %v622 = vmax.f32 %v580, 0.0
        %v623 = vmax.f32 %v582, 0.0
        %v624 = vmax.f32 %v584, 0.0
        %v625 = vmax.f32 %v586, 0.0
        %v626 = vmax.f32 %v590, 0.0
        %v627 = vmax.f32 %v592, 0.0
        %v628 = vmax.f32 %v594, 0.0
        %v629 = vmax.f32 %v596, 0.0
        %v630 = vpack.c.bf16 %v600, %v598
        %v631 = vpack.c.bf16 %v601, %v599
        %v632 = vpack.c.bf16 %v604, %v602
        %v633 = vpack.c.bf16 %v605, %v603
        %v634 = vpack.c.bf16 %v608, %v606
        %v635 = vpack.c.bf16 %v609, %v607
        %v636 = vpack.c.bf16 %v612, %v610
        %v637 = vpack.c.bf16 %v613, %v611
        %v638 = vpack.c.bf16 %v616, %v614
        %v639 = vpack.c.bf16 %v617, %v615
        %v640 = vpack.c.bf16 %v620, %v618
        %v641 = vpack.c.bf16 %v621, %v619
        %v642 = vpack.c.bf16 %v624, %v622
        %v643 = vpack.c.bf16 %v625, %v623
        %v644 = vpack.c.bf16 %v628, %v626
        %v645 = vpack.c.bf16 %v629, %v627
        %v646 = vld [vmem:[#allocation7] sm:$0xff]
        %v647 = vld [vmem:[#allocation7 + $0x8] sm:$0xff]
        %v648 = vld [vmem:[#allocation7 + $0x10] sm:$0xff]
        %v649 = vld [vmem:[#allocation7 + $0x18] sm:$0xff]
        %v650 = vld [vmem:[#allocation7 + $0x20] sm:$0xff]
        %v651 = vld [vmem:[#allocation7 + $0x28] sm:$0xff]
        %v652 = vld [vmem:[#allocation7 + $0x30] sm:$0xff]
        %v653 = vld [vmem:[#allocation7 + $0x38] sm:$0xff]
        %v654 = vld [vmem:[#allocation7 + $0x40] sm:$0xff]
        %v655 = vld [vmem:[#allocation7 + $0x48] sm:$0xff]
        %v656 = vld [vmem:[#allocation7 + $0x50] sm:$0xff]
        %v657 = vld [vmem:[#allocation7 + $0x58] sm:$0xff]
        %v658 = vld [vmem:[#allocation7 + $0x60] sm:$0xff]
        %v659 = vld [vmem:[#allocation7 + $0x68] sm:$0xff]
        %v660 = vld [vmem:[#allocation7 + $0x70] sm:$0xff]
        %v661 = vld [vmem:[#allocation7 + $0x78] sm:$0xff]
        %v662 = vld [vmem:[#allocation7 + $0x80] sm:$0xff]
        %v663 = vld [vmem:[#allocation7 + $0x88] sm:$0xff]
        %v664 = vld [vmem:[#allocation7 + $0x90] sm:$0xff]
        %v665 = vld [vmem:[#allocation7 + $0x98] sm:$0xff]
        %v666 = vld [vmem:[#allocation7 + $0xa0] sm:$0xff]
        %v667 = vld [vmem:[#allocation7 + $0xa8] sm:$0xff]
        %v668 = vld [vmem:[#allocation7 + $0xb0] sm:$0xff]
        %v669 = vld [vmem:[#allocation7 + $0xb8] sm:$0xff]
        %v670 = vld [vmem:[#allocation7 + $0xc0] sm:$0xff]
        %v671 = vld [vmem:[#allocation7 + $0xc8] sm:$0xff]
        %v672 = vld [vmem:[#allocation7 + $0xd0] sm:$0xff]
        %v673 = vld [vmem:[#allocation7 + $0xd8] sm:$0xff]
        %v674 = vld [vmem:[#allocation7 + $0xe0] sm:$0xff]
        %v675 = vld [vmem:[#allocation7 + $0xe8] sm:$0xff]
        %v676 = vld [vmem:[#allocation7 + $0xf0] sm:$0xff]
        %v677 = vld [vmem:[#allocation7 + $0xf8] sm:$0xff]
        %v678 = vld [vmem:[%s4] sm:$0x3]
        %v679 = vunpack.c.l.bf16 %v678
        %v681 = vlaneseq
        %v682 = vshrl.u32 %v681, 7
        %v683 = vsub.s32 0, %v682
        %v684 = vrot.slane %v679, %v683
        %v685 = vlaneseq
        %v686 = vshrl.u32 %v685, 7
        %v687 = vsub.s32 2, %v686
        %v688 = vrot.slane %v679, %v687
        %v691 = vlaneseq
        %v692 = vshrl.u32 %v691, 7
        %v693 = vsub.s32 0, %v692
        %v694 = vrot.slane %v684, %v693
        %v695 = vlaneseq
        %v696 = vshrl.u32 %v695, 7
        %v697 = vsub.s32 0, %v696
        %v698 = vrot.slane %v688, %v697
        %v731 = vunpack.c.l.b16 %v646
        %v732 = vunpack.c.h.b16 %v646
        %v733 = vunpack.c.l.b16 %v647
        %v734 = vunpack.c.h.b16 %v647
        %v735 = vunpack.c.l.b16 %v648
        %v736 = vunpack.c.h.b16 %v648
        %v737 = vunpack.c.l.b16 %v649
        %v738 = vunpack.c.h.b16 %v649
        %v739 = vunpack.c.l.b16 %v650
        %v740 = vunpack.c.h.b16 %v650
        %v741 = vunpack.c.l.b16 %v651
        %v742 = vunpack.c.h.b16 %v651
        %v743 = vunpack.c.l.b16 %v652
        %v744 = vunpack.c.h.b16 %v652
        %v745 = vunpack.c.l.b16 %v653
        %v746 = vunpack.c.h.b16 %v653
        %v747 = vunpack.c.l.b16 %v654
        %v748 = vunpack.c.h.b16 %v654
        %v749 = vunpack.c.l.b16 %v655
        %v750 = vunpack.c.h.b16 %v655
        %v751 = vunpack.c.l.b16 %v656
        %v752 = vunpack.c.h.b16 %v656
        %v753 = vunpack.c.l.b16 %v657
        %v754 = vunpack.c.h.b16 %v657
        %v755 = vunpack.c.l.b16 %v658
        %v756 = vunpack.c.h.b16 %v658
        %v757 = vunpack.c.l.b16 %v659
        %v758 = vunpack.c.h.b16 %v659
        %v759 = vunpack.c.l.b16 %v660
        %v760 = vunpack.c.h.b16 %v660
        %v761 = vunpack.c.l.b16 %v661
        %v762 = vunpack.c.h.b16 %v661
        %v763 = vunpack.c.l.b16 %v662
        %v764 = vunpack.c.h.b16 %v662
        %v765 = vunpack.c.l.b16 %v663
        %v766 = vunpack.c.h.b16 %v663
        %v767 = vunpack.c.l.b16 %v664
        %v768 = vunpack.c.h.b16 %v664
        %v769 = vunpack.c.l.b16 %v665
        %v770 = vunpack.c.h.b16 %v665
        %v771 = vunpack.c.l.b16 %v666
        %v772 = vunpack.c.h.b16 %v666
        %v773 = vunpack.c.l.b16 %v667
        %v774 = vunpack.c.h.b16 %v667
        %v775 = vunpack.c.l.b16 %v668
        %v776 = vunpack.c.h.b16 %v668
        %v777 = vunpack.c.l.b16 %v669
        %v778 = vunpack.c.h.b16 %v669
        %v779 = vunpack.c.l.b16 %v670
        %v780 = vunpack.c.h.b16 %v670
        %v781 = vunpack.c.l.b16 %v671
        %v782 = vunpack.c.h.b16 %v671
        %v783 = vunpack.c.l.b16 %v672
        %v784 = vunpack.c.h.b16 %v672
        %v785 = vunpack.c.l.b16 %v673
        %v786 = vunpack.c.h.b16 %v673
        %v787 = vunpack.c.l.b16 %v674
        %v788 = vunpack.c.h.b16 %v674
        %v789 = vunpack.c.l.b16 %v675
        %v790 = vunpack.c.h.b16 %v675
        %v791 = vunpack.c.l.b16 %v676
        %v792 = vunpack.c.h.b16 %v676
        %v793 = vunpack.c.l.b16 %v677
        %v794 = vunpack.c.h.b16 %v677
        %v795 = vpack.c.b16 %v733, %v731
        %v796 = vpack.c.b16 %v734, %v732
        %v797 = vpack.c.b16 %v737, %v735
        %v798 = vpack.c.b16 %v738, %v736
        %v799 = vpack.c.b16 %v741, %v739
        %v800 = vpack.c.b16 %v742, %v740
        %v801 = vpack.c.b16 %v745, %v743
        %v802 = vpack.c.b16 %v746, %v744
        %v803 = vpack.c.b16 %v749, %v747
        %v804 = vpack.c.b16 %v750, %v748
        %v805 = vpack.c.b16 %v753, %v751
        %v806 = vpack.c.b16 %v754, %v752
        %v807 = vpack.c.b16 %v757, %v755
        %v808 = vpack.c.b16 %v758, %v756
        %v809 = vpack.c.b16 %v761, %v759
        %v810 = vpack.c.b16 %v762, %v760
        %v811 = vpack.c.b16 %v765, %v763
        %v812 = vpack.c.b16 %v766, %v764
        %v813 = vpack.c.b16 %v769, %v767
        %v814 = vpack.c.b16 %v770, %v768
        %v815 = vpack.c.b16 %v773, %v771
        %v816 = vpack.c.b16 %v774, %v772
        %v817 = vpack.c.b16 %v777, %v775
        %v818 = vpack.c.b16 %v778, %v776
        %v819 = vpack.c.b16 %v781, %v779
        %v820 = vpack.c.b16 %v782, %v780
        %v821 = vpack.c.b16 %v785, %v783
        %v822 = vpack.c.b16 %v786, %v784
        %v823 = vpack.c.b16 %v789, %v787
        %v824 = vpack.c.b16 %v790, %v788
        %v825 = vpack.c.b16 %v793, %v791
        %v826 = vpack.c.b16 %v794, %v792
        %859 = vmatprep.subr.bf16.mxu0 %v796
        %860 = vmatpush1.bf16.msra.mxu0 %v795
        %861 = vmatprep.subr.bf16.mxu0 %v798
        %862 = vmatpush1.bf16.msra.mxu0 %v797
        %863 = vmatprep.subr.bf16.mxu0 %v800
        %864 = vmatpush1.bf16.msra.mxu0 %v799
        %865 = vmatprep.subr.bf16.mxu0 %v802
        %866 = vmatpush1.bf16.msra.mxu0 %v801
        %867 = vmatprep.subr.bf16.mxu0 %v804
        %868 = vmatpush1.bf16.msra.mxu0 %v803
        %869 = vmatprep.subr.bf16.mxu0 %v806
        %870 = vmatpush1.bf16.msra.mxu0 %v805
        %871 = vmatprep.subr.bf16.mxu0 %v808
        %872 = vmatpush1.bf16.msra.mxu0 %v807
        %873 = vmatprep.subr.bf16.mxu0 %v810
        %874 = vmatpush1.bf16.msra.mxu0 %v809
        %875 = vmatprep.subr.bf16.mxu0 %v812
        %876 = vmatpush1.bf16.msra.mxu0 %v811
        %877 = vmatprep.subr.bf16.mxu0 %v814
        %878 = vmatpush1.bf16.msra.mxu0 %v813
        %879 = vmatprep.subr.bf16.mxu0 %v816
        %880 = vmatpush1.bf16.msra.mxu0 %v815
        %881 = vmatprep.subr.bf16.mxu0 %v818
        %882 = vmatpush1.bf16.msra.mxu0 %v817
        %883 = vmatprep.subr.bf16.mxu0 %v820
        %884 = vmatpush1.bf16.msra.mxu0 %v819
        %885 = vmatprep.subr.bf16.mxu0 %v822
        %886 = vmatpush1.bf16.msra.mxu0 %v821
        %887 = vmatprep.subr.bf16.mxu0 %v824
        %888 = vmatpush1.bf16.msra.mxu0 %v823
        %889 = vmatprep.subr.bf16.mxu0 %v826
        %890 = vmatpush1.bf16.msra.mxu0 %v825
        %891 = vmatprep.mubr.bf16.mxu0 %v631
        %892 = vmatmul.mubr.bf16.gmra.mrb[0].mxu0 %v630
        %v893 = vpop.f32.mrb[0].mxu0
        %v894 = vadd.f32 %v694, %v893
        %v895 = vpop.f32.mrb[0].mxu0
        %v896 = vadd.f32 %v698, %v895
        %v897 = vpop.f32.mrb[0].mxu0
        %v898 = vadd.f32 %v694, %v897
        %v899 = vpop.f32.mrb[0].mxu0
        %v900 = vadd.f32 %v698, %v899
        %901 = vmatprep.mubr.bf16.mxu0 %v633
        %902 = vmatmul.mubr.bf16.gmra.mrb[0].mxu0 %v632
        %v903 = vpop.f32.mrb[0].mxu0
        %v904 = vadd.f32 %v694, %v903
        %v905 = vpop.f32.mrb[0].mxu0
        %v906 = vadd.f32 %v698, %v905
        %v907 = vpop.f32.mrb[0].mxu0
        %v908 = vadd.f32 %v694, %v907
        %v909 = vpop.f32.mrb[0].mxu0
        %v910 = vadd.f32 %v698, %v909
        %911 = vmatprep.mubr.bf16.mxu0 %v635
        %912 = vmatmul.mubr.bf16.gmra.mrb[0].mxu0 %v634
        %v913 = vpop.f32.mrb[0].mxu0
        %v914 = vadd.f32 %v694, %v913
        %v915 = vpop.f32.mrb[0].mxu0
        %v916 = vadd.f32 %v698, %v915
        %v917 = vpop.f32.mrb[0].mxu0
        %v918 = vadd.f32 %v694, %v917
        %v919 = vpop.f32.mrb[0].mxu0
        %v920 = vadd.f32 %v698, %v919
        %921 = vmatprep.mubr.bf16.mxu0 %v637
        %922 = vmatmul.mubr.bf16.gmra.mrb[0].mxu0 %v636
        %v923 = vpop.f32.mrb[0].mxu0
        %v924 = vadd.f32 %v694, %v923
        %v925 = vpop.f32.mrb[0].mxu0
        %v926 = vadd.f32 %v698, %v925
        %v927 = vpop.f32.mrb[0].mxu0
        %v928 = vadd.f32 %v694, %v927
        %v929 = vpop.f32.mrb[0].mxu0
        %v930 = vadd.f32 %v698, %v929
        %931 = vmatprep.mubr.bf16.mxu0 %v639
        %932 = vmatmul.mubr.bf16.gmra.mrb[0].mxu0 %v638
        %v933 = vpop.f32.mrb[0].mxu0
        %v934 = vadd.f32 %v694, %v933
        %v935 = vpop.f32.mrb[0].mxu0
        %v936 = vadd.f32 %v698, %v935
        %v937 = vpop.f32.mrb[0].mxu0
        %v938 = vadd.f32 %v694, %v937
        %v939 = vpop.f32.mrb[0].mxu0
        %v940 = vadd.f32 %v698, %v939
        %941 = vmatprep.mubr.bf16.mxu0 %v641
        %942 = vmatmul.mubr.bf16.gmra.mrb[0].mxu0 %v640
        %v943 = vpop.f32.mrb[0].mxu0
        %v944 = vadd.f32 %v694, %v943
        %v945 = vpop.f32.mrb[0].mxu0
        %v946 = vadd.f32 %v698, %v945
        %v947 = vpop.f32.mrb[0].mxu0
        %v948 = vadd.f32 %v694, %v947
        %v949 = vpop.f32.mrb[0].mxu0
        %v950 = vadd.f32 %v698, %v949
        %951 = vmatprep.mubr.bf16.mxu0 %v643
        %952 = vmatmul.mubr.bf16.gmra.mrb[0].mxu0 %v642
        %v953 = vpop.f32.mrb[0].mxu0
        %v954 = vadd.f32 %v694, %v953
        %v955 = vpop.f32.mrb[0].mxu0
        %v956 = vadd.f32 %v698, %v955
        %v957 = vpop.f32.mrb[0].mxu0
        %v958 = vadd.f32 %v694, %v957
        %v959 = vpop.f32.mrb[0].mxu0
        %v960 = vadd.f32 %v698, %v959
        %961 = vmatprep.mubr.bf16.mxu0 %v645
        %962 = vmatmul.mubr.bf16.gmra.mrb[0].mxu0 %v644
        %v963 = vpop.f32.mrb[0].mxu0
        %v964 = vadd.f32 %v694, %v963
        %v965 = vpop.f32.mrb[0].mxu0
        %v966 = vadd.f32 %v698, %v965
        %v967 = vpop.f32.mrb[0].mxu0
        %v968 = vadd.f32 %v694, %v967
        %v969 = vpop.f32.mrb[0].mxu0
        %v970 = vadd.f32 %v698, %v969
        %971 = vdwg.mxu0
        %v972 = vmax.f32 %v894, 0.0
        %v973 = vmax.f32 %v896, 0.0
        %v974 = vmax.f32 %v898, 0.0
        %v975 = vmax.f32 %v900, 0.0
        %v976 = vmax.f32 %v904, 0.0
        %v977 = vmax.f32 %v906, 0.0
        %v978 = vmax.f32 %v908, 0.0
        %v979 = vmax.f32 %v910, 0.0
        %v980 = vmax.f32 %v914, 0.0
        %v981 = vmax.f32 %v916, 0.0
        %v982 = vmax.f32 %v918, 0.0
        %v983 = vmax.f32 %v920, 0.0
        %v984 = vmax.f32 %v924, 0.0
        %v985 = vmax.f32 %v926, 0.0
        %v986 = vmax.f32 %v928, 0.0
        %v987 = vmax.f32 %v930, 0.0
        %v988 = vmax.f32 %v934, 0.0
        %v989 = vmax.f32 %v936, 0.0
        %v990 = vmax.f32 %v938, 0.0
        %v991 = vmax.f32 %v940, 0.0
        %v992 = vmax.f32 %v944, 0.0
        %v993 = vmax.f32 %v946, 0.0
        %v994 = vmax.f32 %v948, 0.0
        %v995 = vmax.f32 %v950, 0.0
        %v996 = vmax.f32 %v954, 0.0
        %v997 = vmax.f32 %v956, 0.0
        %v998 = vmax.f32 %v958, 0.0
        %v999 = vmax.f32 %v960, 0.0
        %v1000 = vmax.f32 %v964, 0.0
        %v1001 = vmax.f32 %v966, 0.0
        %v1002 = vmax.f32 %v968, 0.0
        %v1003 = vmax.f32 %v970, 0.0
        %v1004 = vpack.c.bf16 %v974, %v972
        %v1005 = vpack.c.bf16 %v975, %v973
        %v1006 = vpack.c.bf16 %v978, %v976
        %v1007 = vpack.c.bf16 %v979, %v977
        %v1008 = vpack.c.bf16 %v982, %v980
        %v1009 = vpack.c.bf16 %v983, %v981
        %v1010 = vpack.c.bf16 %v986, %v984
        %v1011 = vpack.c.bf16 %v987, %v985
        %v1012 = vpack.c.bf16 %v990, %v988
        %v1013 = vpack.c.bf16 %v991, %v989
        %v1014 = vpack.c.bf16 %v994, %v992
        %v1015 = vpack.c.bf16 %v995, %v993
        %v1016 = vpack.c.bf16 %v998, %v996
        %v1017 = vpack.c.bf16 %v999, %v997
        %v1018 = vpack.c.bf16 %v1002, %v1000
        %v1019 = vpack.c.bf16 %v1003, %v1001
        %v1020 = vld [vmem:[#allocation8] sm:$0xf]
        %v1021 = vld [vmem:[#allocation8 + $0x4] sm:$0xf]
        %v1022 = vld [vmem:[#allocation8 + $0x8] sm:$0xf]
        %v1023 = vld [vmem:[#allocation8 + $0xc] sm:$0xf]
        %v1024 = vld [vmem:[#allocation8 + $0x10] sm:$0xf]
        %v1025 = vld [vmem:[#allocation8 + $0x14] sm:$0xf]
        %v1026 = vld [vmem:[#allocation8 + $0x18] sm:$0xf]
        %v1027 = vld [vmem:[#allocation8 + $0x1c] sm:$0xf]
        %v1028 = vld [vmem:[#allocation8 + $0x20] sm:$0xf]
        %v1029 = vld [vmem:[#allocation8 + $0x24] sm:$0xf]
        %v1030 = vld [vmem:[#allocation8 + $0x28] sm:$0xf]
        %v1031 = vld [vmem:[#allocation8 + $0x2c] sm:$0xf]
        %v1032 = vld [vmem:[#allocation8 + $0x30] sm:$0xf]
        %v1033 = vld [vmem:[#allocation8 + $0x34] sm:$0xf]
        %v1034 = vld [vmem:[#allocation8 + $0x38] sm:$0xf]
        %v1035 = vld [vmem:[#allocation8 + $0x3c] sm:$0xf]
        %v1036 = vld [vmem:[#allocation8 + $0x40] sm:$0xf]
        %v1037 = vld [vmem:[#allocation8 + $0x44] sm:$0xf]
        %v1038 = vld [vmem:[#allocation8 + $0x48] sm:$0xf]
        %v1039 = vld [vmem:[#allocation8 + $0x4c] sm:$0xf]
        %v1040 = vld [vmem:[#allocation8 + $0x50] sm:$0xf]
        %v1041 = vld [vmem:[#allocation8 + $0x54] sm:$0xf]
        %v1042 = vld [vmem:[#allocation8 + $0x58] sm:$0xf]
        %v1043 = vld [vmem:[#allocation8 + $0x5c] sm:$0xf]
        %v1044 = vld [vmem:[#allocation8 + $0x60] sm:$0xf]
        %v1045 = vld [vmem:[#allocation8 + $0x64] sm:$0xf]
        %v1046 = vld [vmem:[#allocation8 + $0x68] sm:$0xf]
        %v1047 = vld [vmem:[#allocation8 + $0x6c] sm:$0xf]
        %v1048 = vld [vmem:[#allocation8 + $0x70] sm:$0xf]
        %v1049 = vld [vmem:[#allocation8 + $0x74] sm:$0xf]
        %v1050 = vld [vmem:[#allocation8 + $0x78] sm:$0xf]
        %v1051 = vld [vmem:[#allocation8 + $0x7c] sm:$0xf]
        %v1052 = vld [vmem:[%s6] sm:$0x1]
        %v1053 = vunpack.c.l.bf16 %v1052
        %v1054 = vlaneseq
        %v1055 = vshrl.u32 %v1054, 7
        %v1056 = vsub.s32 0, %v1055
        %v1057 = vrot.slane %v1053, %v1056
        %v1090 = vunpack.c.l.b16 %v1020
        %v1091 = vunpack.c.l.b16 %v1021
        %v1092 = vunpack.c.l.b16 %v1022
        %v1093 = vunpack.c.l.b16 %v1023
        %v1094 = vunpack.c.l.b16 %v1024
        %v1095 = vunpack.c.l.b16 %v1025
        %v1096 = vunpack.c.l.b16 %v1026
        %v1097 = vunpack.c.l.b16 %v1027
        %v1098 = vunpack.c.l.b16 %v1028
        %v1099 = vunpack.c.l.b16 %v1029
        %v1100 = vunpack.c.l.b16 %v1030
        %v1101 = vunpack.c.l.b16 %v1031
        %v1102 = vunpack.c.l.b16 %v1032
        %v1103 = vunpack.c.l.b16 %v1033
        %v1104 = vunpack.c.l.b16 %v1034
        %v1105 = vunpack.c.l.b16 %v1035
        %v1106 = vunpack.c.l.b16 %v1036
        %v1107 = vunpack.c.l.b16 %v1037
        %v1108 = vunpack.c.l.b16 %v1038
        %v1109 = vunpack.c.l.b16 %v1039
        %v1110 = vunpack.c.l.b16 %v1040
        %v1111 = vunpack.c.l.b16 %v1041
        %v1112 = vunpack.c.l.b16 %v1042
        %v1113 = vunpack.c.l.b16 %v1043
        %v1114 = vunpack.c.l.b16 %v1044
        %v1115 = vunpack.c.l.b16 %v1045
        %v1116 = vunpack.c.l.b16 %v1046
        %v1117 = vunpack.c.l.b16 %v1047
        %v1118 = vunpack.c.l.b16 %v1048
        %v1119 = vunpack.c.l.b16 %v1049
        %v1120 = vunpack.c.l.b16 %v1050
        %v1121 = vunpack.c.l.b16 %v1051
        %v1122 = vpack.c.b16 %v1091, %v1090
        %v1123 = vpack.c.b16 %v1093, %v1092
        %v1124 = vpack.c.b16 %v1095, %v1094
        %v1125 = vpack.c.b16 %v1097, %v1096
        %v1126 = vpack.c.b16 %v1099, %v1098
        %v1127 = vpack.c.b16 %v1101, %v1100
        %v1128 = vpack.c.b16 %v1103, %v1102
        %v1129 = vpack.c.b16 %v1105, %v1104
        %v1130 = vpack.c.b16 %v1107, %v1106
        %v1131 = vpack.c.b16 %v1109, %v1108
        %v1132 = vpack.c.b16 %v1111, %v1110
        %v1133 = vpack.c.b16 %v1113, %v1112
        %v1134 = vpack.c.b16 %v1115, %v1114
        %v1135 = vpack.c.b16 %v1117, %v1116
        %v1136 = vpack.c.b16 %v1119, %v1118
        %v1137 = vpack.c.b16 %v1121, %v1120
        %1154 = vmatprep.subr.bf16.mxu0 0
        %1155 = vmatpush1.bf16.msra.mxu0 %v1122
        %1156 = vmatprep.subr.bf16.mxu0 0
        %1157 = vmatpush1.bf16.msra.mxu0 %v1123
        %1158 = vmatprep.subr.bf16.mxu0 0
        %1159 = vmatpush1.bf16.msra.mxu0 %v1124
        %1160 = vmatprep.subr.bf16.mxu0 0
        %1161 = vmatpush1.bf16.msra.mxu0 %v1125
        %1162 = vmatprep.subr.bf16.mxu0 0
        %1163 = vmatpush1.bf16.msra.mxu0 %v1126
        %1164 = vmatprep.subr.bf16.mxu0 0
        %1165 = vmatpush1.bf16.msra.mxu0 %v1127
        %1166 = vmatprep.subr.bf16.mxu0 0
        %1167 = vmatpush1.bf16.msra.mxu0 %v1128
        %1168 = vmatprep.subr.bf16.mxu0 0
        %1169 = vmatpush1.bf16.msra.mxu0 %v1129
        %1170 = vmatprep.subr.bf16.mxu0 0
        %1171 = vmatpush1.bf16.msra.mxu0 %v1130
        %1172 = vmatprep.subr.bf16.mxu0 0
        %1173 = vmatpush1.bf16.msra.mxu0 %v1131
        %1174 = vmatprep.subr.bf16.mxu0 0
        %1175 = vmatpush1.bf16.msra.mxu0 %v1132
        %1176 = vmatprep.subr.bf16.mxu0 0
        %1177 = vmatpush1.bf16.msra.mxu0 %v1133
        %1178 = vmatprep.subr.bf16.mxu0 0
        %1179 = vmatpush1.bf16.msra.mxu0 %v1134
        %1180 = vmatprep.subr.bf16.mxu0 0
        %1181 = vmatpush1.bf16.msra.mxu0 %v1135
        %1182 = vmatprep.subr.bf16.mxu0 0
        %1183 = vmatpush1.bf16.msra.mxu0 %v1136
        %1184 = vmatprep.subr.bf16.mxu0 0
        %1185 = vmatpush1.bf16.msra.mxu0 %v1137
        %1186 = vmatprep.mubr.bf16.mxu0 %v1005
        %1187 = vmatmul.mubr.bf16.gmra.mrb[0].mxu0 %v1004
        %v1188 = vpop.f32.mrb[0].mxu0
        %v1189 = vadd.f32 %v1057, %v1188
        %v1190 = vpop.f32.mrb[0].mxu0
        %v1191 = vpop.f32.mrb[0].mxu0
        %v1192 = vadd.f32 %v1057, %v1191
        %v1193 = vpop.f32.mrb[0].mxu0
        %1194 = vmatprep.mubr.bf16.mxu0 %v1007
        %1195 = vmatmul.mubr.bf16.gmra.mrb[0].mxu0 %v1006
        %v1196 = vpop.f32.mrb[0].mxu0
        %v1197 = vadd.f32 %v1057, %v1196
        %v1198 = vpop.f32.mrb[0].mxu0
        %v1199 = vpop.f32.mrb[0].mxu0
        %v1200 = vadd.f32 %v1057, %v1199
        %v1201 = vpop.f32.mrb[0].mxu0
        %1202 = vmatprep.mubr.bf16.mxu0 %v1009
        %1203 = vmatmul.mubr.bf16.gmra.mrb[0].mxu0 %v1008
        %v1204 = vpop.f32.mrb[0].mxu0
        %v1205 = vadd.f32 %v1057, %v1204
        %v1206 = vpop.f32.mrb[0].mxu0
        %v1207 = vpop.f32.mrb[0].mxu0
        %v1208 = vadd.f32 %v1057, %v1207
        %v1209 = vpop.f32.mrb[0].mxu0
        %1210 = vmatprep.mubr.bf16.mxu0 %v1011
        %1211 = vmatmul.mubr.bf16.gmra.mrb[0].mxu0 %v1010
        %v1212 = vpop.f32.mrb[0].mxu0
        %v1213 = vadd.f32 %v1057, %v1212
        %v1214 = vpop.f32.mrb[0].mxu0
        %v1215 = vpop.f32.mrb[0].mxu0
        %v1216 = vadd.f32 %v1057, %v1215
        %v1217 = vpop.f32.mrb[0].mxu0
        %1218 = vmatprep.mubr.bf16.mxu0 %v1013
        %1219 = vmatmul.mubr.bf16.gmra.mrb[0].mxu0 %v1012
        %v1220 = vpop.f32.mrb[0].mxu0
        %v1221 = vadd.f32 %v1057, %v1220
        %v1222 = vpop.f32.mrb[0].mxu0
        %v1223 = vpop.f32.mrb[0].mxu0
        %v1224 = vadd.f32 %v1057, %v1223
        %v1225 = vpop.f32.mrb[0].mxu0
        %1226 = vmatprep.mubr.bf16.mxu0 %v1015
        %1227 = vmatmul.mubr.bf16.gmra.mrb[0].mxu0 %v1014
        %v1228 = vpop.f32.mrb[0].mxu0
        %v1229 = vadd.f32 %v1057, %v1228
        %v1230 = vpop.f32.mrb[0].mxu0
        %v1231 = vpop.f32.mrb[0].mxu0
        %v1232 = vadd.f32 %v1057, %v1231
        %v1233 = vpop.f32.mrb[0].mxu0
        %1234 = vmatprep.mubr.bf16.mxu0 %v1017
        %1235 = vmatmul.mubr.bf16.gmra.mrb[0].mxu0 %v1016
        %v1236 = vpop.f32.mrb[0].mxu0
        %v1237 = vadd.f32 %v1057, %v1236
        %v1238 = vpop.f32.mrb[0].mxu0
        %v1239 = vpop.f32.mrb[0].mxu0
        %v1240 = vadd.f32 %v1057, %v1239
        %v1241 = vpop.f32.mrb[0].mxu0
        %1242 = vmatprep.mubr.bf16.mxu0 %v1019
        %1243 = vmatmul.mubr.bf16.gmra.mrb[0].mxu0 %v1018
        %v1244 = vpop.f32.mrb[0].mxu0
        %v1245 = vadd.f32 %v1057, %v1244
        %v1246 = vpop.f32.mrb[0].mxu0
        %v1247 = vpop.f32.mrb[0].mxu0
        %v1248 = vadd.f32 %v1057, %v1247
        %v1249 = vpop.f32.mrb[0].mxu0
        %1250 = vdwg.mxu0
        %1251 = vst [vmem:[%s340] sm:$0xff] %v1189
        %1252 = vst [vmem:[%s340 + $0x8] sm:$0xff] %v1192
        %1253 = vst [vmem:[%s340 + $0x10] sm:$0xff] %v1197
        %1254 = vst [vmem:[%s340 + $0x18] sm:$0xff] %v1200
        %1255 = vst [vmem:[%s340 + $0x20] sm:$0xff] %v1205
        %1256 = vst [vmem:[%s340 + $0x28] sm:$0xff] %v1208
        %1257 = vst [vmem:[%s340 + $0x30] sm:$0xff] %v1213
        %1258 = vst [vmem:[%s340 + $0x38] sm:$0xff] %v1216
        %1259 = vst [vmem:[%s340 + $0x40] sm:$0xff] %v1221
        %1260 = vst [vmem:[%s340 + $0x48] sm:$0xff] %v1224
        %1261 = vst [vmem:[%s340 + $0x50] sm:$0xff] %v1229
        %1262 = vst [vmem:[%s340 + $0x58] sm:$0xff] %v1232
        %1263 = vst [vmem:[%s340 + $0x60] sm:$0xff] %v1237
        %1264 = vst [vmem:[%s340 + $0x68] sm:$0xff] %v1240
        %1265 = vst [vmem:[%s340 + $0x70] sm:$0xff] %v1245
        %1266 = vst [vmem:[%s340 + $0x78] sm:$0xff] %v1248
        %s1267 = sand.u32 %s186, 1
        %s1268 = scalar_lea.sflag [#allocation4], %s1267
        %s1269 = sand.u32 %s186, 1
        %s1270 = smul.addr %s1269, 128
        %s1271 = scalar_lea.vmem [#allocation10], %s1270
        // Predicated region
        $region65: #{tpu_custom_call.1} parent=47 // pred_check
          %p1272 = pneg %p196
        $region66: #{tpu_custom_call.1} parent=47 // pred_check_branch
          %1274 = sbr.rel (%p1272) target = $region68
        $region67: #{tpu_custom_call.1} parent=47 // pred_region
          %s1275 = smul.u32 16, %s26
          %s1277 = ssub.s32 2048, 2048
          %1278 = vsyncadd %s1268, %s1277
          %s1279 = smul.addr %s1275, 128
          %s1280 = scalar_lea.hbm %s7, %s1279
          %s1281 = sshll.u32 %s1271, 4
          %s1282 = int_to_ptr.vmem [resolvable:$true] %s1281
          %1287 = dma.vmem_to_hbm [thread:$0]  %s1282, 2048, %s1280, %s1268, 128, 128, 8
        $region68: #{tpu_custom_call.1} parent=47 // pred_fallthru
          _
      $region48: #{tpu_custom_call.1} parent=5 // pred_fallthru
        _
      %p1288 = scmp.le.s32.totalorder 2, %s21
      // Predicated region
      $region69: #{tpu_custom_call.1} parent=5 // pred_check
        %p1289 = pneg %p1288
      $region70: #{tpu_custom_call.1} parent=5 // pred_check_branch
        %1291 = sbr.rel (%p1289) target = $region72
      $region71: #{tpu_custom_call.1} parent=5 // pred_region
        %s1292 = ssub.s32 %s21, 2
        // Predicated region
        $region73: #{tpu_custom_call.1} parent=71 // pred_check
          %p1293 = pneg %p202
        $region74: #{tpu_custom_call.1} parent=71 // pred_check_branch
          %1295 = sbr.rel (%p1293) target = $region76
        $region75: #{tpu_custom_call.1} parent=71 // pred_region
          %s1296 = sand.u32 %s187, 1
          %s1297 = scalar_lea.sflag [#allocation4], %s1296
          %s1298 = sand.u32 %s187, 1
          %s1299 = smul.addr %s1298, 128
          %s1300 = scalar_lea.vmem [#allocation10], %s1299
          %1301 = dma.done %s1297, 2048
        $region76: #{tpu_custom_call.1} parent=71 // pred_fallthru
          _
      $region72: #{tpu_custom_call.1} parent=5 // pred_fallthru
        _
    $region6: #{tpu_custom_call.1} parent=1 // loop_footer
      %s25 = sadd.s32 1, %s21
    $region7: #{tpu_custom_call.1} parent=1 // loop_footer_branch
      %20 = sbr.rel target = $region3
    $region8: #{tpu_custom_call.1} parent=1 // loop_exit
      _
    %1302 = vsyncpa [#allocation3], 1
    %s1303 = scalar_lea.sflag [#allocation3], 1
    %1304 = vsyncpa %s1303, 1
    %1305 = vsyncpa [#allocation6], 1
    %1306 = vsyncpa [#allocation9], 1
    %1307 = vsyncpa [#allocation4], 1
    %s1308 = scalar_lea.sflag [#allocation4], 1
    %1309 = vsyncpa %s1308, 1

</llo_original>
